<compile_context>
chip_gen: v7x
topology: tpu7x:2x2x1
jax: 0.10.0
libtpu: 0.0.40
codegen_flags: <defaults>
</compile_context>

<pallas_src>
import functools

import jax
import jax.numpy as jnp
import numpy as np
from jax import lax
from jax.experimental import pallas as pl
from jax.experimental.pallas import tpu as pltpu


def _multibox_loss_kernel(loc_p_ref, conf_ref, loc_t_ref, tgt_ref,
                          out_l_ref, out_c_ref, out_n_ref,
                          *, num_priors, num_priors_padded, negpos_ratio):
    P = num_priors           # real prior count
    LP = num_priors_padded   # lane-padded prior count (multiple of 128)

    loc_p = loc_p_ref[0]     # (4, LP)  f32, priors on lanes
    loc_t = loc_t_ref[0]     # (4, LP)
    conf = conf_ref[0]       # (C, LP)  f32, classes on sublanes
    tgt = tgt_ref[0]         # (1, LP)  int32

    C = conf.shape[0]

    pos = tgt > 0                       # (1, LP) bool (padded lanes have tgt==0)
    posf = pos.astype(jnp.float32)      # (1, LP)

    # ---- localization loss: smooth-L1 over positive priors ------------------
    diff = loc_p - loc_t
    absd = jnp.abs(diff)
    sl1 = jnp.where(absd < 1.0, 0.5 * diff * diff, absd - 0.5)      # (4, LP)
    loss_l_b = jnp.sum(jnp.sum(sl1, axis=0, keepdims=True) * posf,
                       axis=1, keepdims=True)                       # (1, 1)

    # ---- per-prior confidence loss: logsumexp(conf) - conf[target] ----------
    cmax = jnp.max(conf, axis=0, keepdims=True)                     # (1, LP)
    sse = jnp.sum(jnp.exp(conf - cmax), axis=0, keepdims=True)      # (1, LP)
    lse = jnp.log(sse) + cmax                                       # (1, LP)
    cls_iota = lax.broadcasted_iota(jnp.int32, (C, LP), 0)
    conf_tgt = jnp.sum(jnp.where(cls_iota == tgt, conf, 0.0),
                       axis=0, keepdims=True)                       # (1, LP)
    lc = lse - conf_tgt                                             # (1, LP), >= 0

    # positives always contribute their full conf loss
    pos_lc_sum = jnp.sum(lc * posf, axis=1, keepdims=True)          # (1, 1)
    num_pos_f = jnp.sum(posf, axis=1, keepdims=True)                # (1, 1)

    # ---- hard-negative mining via exact top-k threshold search --------------
    # Mined values: positives forced to 0 (as in the reference); padded lanes 0
    # (extra zeros never change the top-num_neg sum since all real values >= 0
    # and num_neg <= P - 1).
    if LP == P:
        drop = pos
    else:
        lane = lax.broadcasted_iota(jnp.int32, (1, LP), 1)
        drop = jnp.logical_or(pos, lane >= P)
    lc_mine = jnp.where(drop, 0.0, lc)                              # (1, LP), >= 0

    num_neg_i = jnp.minimum(negpos_ratio * num_pos_f.astype(jnp.int32),
                            P - 1)                                  # (1, 1) int32
    num_neg_f = num_neg_i.astype(jnp.float32)

    # For non-negative f32 the int32 bit pattern is monotone in the value, so a
    # MSB-first bisection over bit patterns finds the exact num_neg-th largest
    # value in 31 lane-dense passes (no (P,P) intermediate, no transposes).
    bits = pltpu.bitcast(lc_mine, jnp.int32)                        # (1, LP)
    t = jnp.zeros((1, 1), jnp.int32)
    for k in range(30, -1, -1):                                     # static unroll
        cand = t | jnp.int32(1 << k)
        cnt = jnp.sum((bits >= cand).astype(jnp.float32),
                      axis=1, keepdims=True)                        # (1, 1)
        t = jnp.where(cnt >= num_neg_f, cand, t)
    # t == bit pattern of the num_neg-th largest lc_mine (when num_neg >= 1)

    tau = pltpu.bitcast(t, jnp.float32)                             # (1, 1)
    gt = bits > t                                                   # (1, LP)
    g_cnt = jnp.sum(gt.astype(jnp.float32), axis=1, keepdims=True)  # (1, 1)
    g_sum = jnp.sum(jnp.where(gt, lc_mine, 0.0),
                    axis=1, keepdims=True)                          # (1, 1)
    neg_sum = jnp.where(num_neg_f > 0.0,
                        g_sum + (num_neg_f - g_cnt) * tau,
                        jnp.zeros_like(g_sum))                      # (1, 1)

    loss_c_b = pos_lc_sum + neg_sum

    out_l_ref[0] = loss_l_b
    out_c_ref[0] = loss_c_b
    out_n_ref[0] = num_pos_f


def multibox_loss(loc_pred, conf_pred, loc_t, conf_t, *, num_classes,
                  negpos_ratio=3, threshold=0.5, variance=(0.1, 0.2)):
    """Pallas implementation of multiboxloss.forward (post-match part).

    threshold / variance are only consumed by the (undefined) match() step in
    the reference module and are unused here.
    """
    del threshold, variance
    B, P, _ = loc_pred.shape
    C = num_classes
    assert conf_pred.shape == (B, P, C)

    LP = ((P + 127) // 128) * 128
    pad = LP - P

    # Lane-dense layout: priors mapped to the 128-lane axis for every tensor.
    loc_p_l = jnp.transpose(loc_pred.astype(jnp.float32), (0, 2, 1))    # (B,4,P)
    loc_t_l = jnp.transpose(loc_t.astype(jnp.float32), (0, 2, 1))       # (B,4,P)
    conf_l = jnp.transpose(conf_pred.astype(jnp.float32), (0, 2, 1))    # (B,C,P)
    tgt_l = conf_t.astype(jnp.int32).reshape(B, 1, P)                   # (B,1,P)
    if pad:
        loc_p_l = jnp.pad(loc_p_l, ((0, 0), (0, 0), (0, pad)))
        loc_t_l = jnp.pad(loc_t_l, ((0, 0), (0, 0), (0, pad)))
        conf_l = jnp.pad(conf_l, ((0, 0), (0, 0), (0, pad)))
        tgt_l = jnp.pad(tgt_l, ((0, 0), (0, 0), (0, pad)))

    kernel = functools.partial(_multibox_loss_kernel,
                               num_priors=P, num_priors_padded=LP,
                               negpos_ratio=int(negpos_ratio))

    part_l, part_c, part_n = pl.pallas_call(
        kernel,
        out_shape=(jax.ShapeDtypeStruct((B, 1, 1), jnp.float32),
                   jax.ShapeDtypeStruct((B, 1, 1), jnp.float32),
                   jax.ShapeDtypeStruct((B, 1, 1), jnp.float32)),
        grid_spec=pltpu.PrefetchScalarGridSpec(
            num_scalar_prefetch=0,
            grid=(B,),
            in_specs=[
                pl.BlockSpec((1, 4, LP), lambda b: (b, 0, 0)),   # loc_pred
                pl.BlockSpec((1, C, LP), lambda b: (b, 0, 0)),   # conf_pred
                pl.BlockSpec((1, 4, LP), lambda b: (b, 0, 0)),   # loc_t
                pl.BlockSpec((1, 1, LP), lambda b: (b, 0, 0)),   # conf_t
            ],
            out_specs=(
                pl.BlockSpec((1, 1, 1), lambda b: (b, 0, 0)),    # loss_l partial
                pl.BlockSpec((1, 1, 1), lambda b: (b, 0, 0)),    # loss_c partial
                pl.BlockSpec((1, 1, 1), lambda b: (b, 0, 0)),    # num_pos partial
            ),
        ),
        compiler_params=pltpu.CompilerParams(
            dimension_semantics=("parallel",)),
    )(loc_p_l, conf_l, loc_t_l, tgt_l)

    # Final reduction / normalization in the wrapper (keeps the batch grid axis
    # fully parallel).  N == 0 gives NaN/Inf, matching the PyTorch reference.
    n_total = jnp.sum(part_n)
    return jnp.sum(part_l) / n_total, jnp.sum(part_c) / n_total


def _multibox_loss_ref(loc_pred, conf_pred, loc_t, conf_t, *, num_classes,
                       negpos_ratio=3):
    """Pure-JAX reference mirroring the PyTorch forward (post-match)."""
    B, P, _ = loc_pred.shape
    pos = conf_t > 0
    num_pos = jnp.sum(pos.astype(jnp.int32), axis=1, keepdims=True)

    diff = loc_pred - loc_t
    absd = jnp.abs(diff)
    sl1 = jnp.where(absd < 1.0, 0.5 * diff * diff, absd - 0.5)
    loss_l = jnp.sum(sl1 * pos[..., None].astype(jnp.float32))

    row_max = jnp.max(conf_pred, axis=-1, keepdims=True)
    lse = jnp.log(jnp.sum(jnp.exp(conf_pred - row_max), axis=-1, keepdims=True)) + row_max
    conf_tgt = jnp.take_along_axis(conf_pred, conf_t[..., None], axis=-1)
    lc = (lse - conf_tgt)[..., 0]                      # (B, P)
    lc_mine = jnp.where(pos, 0.0, lc)

    loss_idx = jnp.argsort(-lc_mine, axis=1)           # descending, stable
    idx_rank = jnp.argsort(loss_idx, axis=1)
    num_neg = jnp.minimum(negpos_ratio * num_pos, P - 1)
    neg = idx_rank < num_neg
    selected = pos | neg
    loss_c = jnp.sum(jnp.where(selected, lc, 0.0))

    N = jnp.sum(num_pos).astype(jnp.float32)
    return loss_l / N, loss_c / N


if __name__ == "__main__":
    def run_case(B, P, C, case_idx):
        key = jax.random.fold_in(jax.random.PRNGKey(0), case_idx)
        k1, k2, k3, k4, k5 = jax.random.split(key, 5)

        loc_pred = jax.random.normal(k1, (B, P, 4), jnp.float32)
        conf_pred = jax.random.normal(k2, (B, P, C), jnp.float32)
        # Synthetic matched targets (see TODO(synk) above).
        loc_t = 0.5 * jax.random.normal(k3, (B, P, 4), jnp.float32)
        is_pos = jax.random.bernoulli(k4, 0.15, (B, P))
        cls = jax.random.randint(k5, (B, P), 1, C)
        conf_t = jnp.where(is_pos, cls, 0).astype(jnp.int32)

        loss_l, loss_c = multibox_loss(loc_pred, conf_pred, loc_t, conf_t,
                                       num_classes=C, negpos_ratio=3)
        jax.block_until_ready((loss_l, loss_c))

        ref_l, ref_c = _multibox_loss_ref(loc_pred, conf_pred, loc_t, conf_t,
                                          num_classes=C, negpos_ratio=3)
        np.testing.assert_allclose(np.asarray(loss_l), np.asarray(ref_l),
                                   rtol=1e-3, atol=1e-3)
        np.testing.assert_allclose(np.asarray(loss_c), np.asarray(ref_c),
                                   rtol=1e-3, atol=1e-3)

    run_case(2, 128, 8, 0)    # lane-aligned prior count
    run_case(2, 100, 6, 1)    # prior count that needs lane padding
    print("KERNEL_OK")
</pallas_src>

<mosaic_0001>
module attributes {stable_mosaic.version = 11 : i64} {
  func.func @_multibox_loss_kernel(%arg0: i32, %arg1: memref<1x4x128xf32, #tpu.memory_space<vmem>>, %arg2: memref<1x8x128xf32, #tpu.memory_space<vmem>>, %arg3: memref<1x4x128xf32, #tpu.memory_space<vmem>>, %arg4: memref<1x1x128xi32, #tpu.memory_space<vmem>>, %arg5: memref<1x1x1xf32, #tpu.memory_space<vmem>>, %arg6: memref<1x1x1xf32, #tpu.memory_space<vmem>>, %arg7: memref<1x1x1xf32, #tpu.memory_space<vmem>>) attributes {dimension_semantics = [#tpu.dimension_semantics<parallel>], iteration_bounds = array<i64: 2>, scalar_prefetch = 0 : i64, scratch_operands = 0 : i64, tpu.core_type = #tpu.core_type<tc>, window_params = [{transform_indices = @transform_0, window_bounds = array<i64: 1, 4, 128>}, {transform_indices = @transform_1, window_bounds = array<i64: 1, 8, 128>}, {transform_indices = @transform_2, window_bounds = array<i64: 1, 4, 128>}, {transform_indices = @transform_3, window_bounds = array<i64: 1, 1, 128>}, {transform_indices = @transform_4, window_bounds = array<i64: 1, 1, 1>}, {transform_indices = @transform_5, window_bounds = array<i64: 1, 1, 1>}, {transform_indices = @transform_6, window_bounds = array<i64: 1, 1, 1>}]} {
    %c0 = arith.constant 0 : index
    %c0_0 = arith.constant 0 : index
    %c0_1 = arith.constant 0 : index
    %0 = vector.load %arg1[%c0, %c0_0, %c0_1] : memref<1x4x128xf32, #tpu.memory_space<vmem>>, vector<1x4x128xf32>
    %1 = vector.shape_cast %0 : vector<1x4x128xf32> to vector<4x128xf32>
    %c0_2 = arith.constant 0 : index
    %c0_3 = arith.constant 0 : index
    %c0_4 = arith.constant 0 : index
    %2 = vector.load %arg3[%c0_2, %c0_3, %c0_4] : memref<1x4x128xf32, #tpu.memory_space<vmem>>, vector<1x4x128xf32>
    %3 = vector.shape_cast %2 : vector<1x4x128xf32> to vector<4x128xf32>
    %c0_5 = arith.constant 0 : index
    %c0_6 = arith.constant 0 : index
    %c0_7 = arith.constant 0 : index
    %4 = vector.load %arg2[%c0_5, %c0_6, %c0_7] : memref<1x8x128xf32, #tpu.memory_space<vmem>>, vector<1x8x128xf32>
    %5 = vector.shape_cast %4 : vector<1x8x128xf32> to vector<8x128xf32>
    %c0_8 = arith.constant 0 : index
    %c0_9 = arith.constant 0 : index
    %c0_10 = arith.constant 0 : index
    %6 = vector.load %arg4[%c0_8, %c0_9, %c0_10] : memref<1x1x128xi32, #tpu.memory_space<vmem>>, vector<1x1x128xi32>
    %7 = vector.shape_cast %6 : vector<1x1x128xi32> to vector<1x128xi32>
    %c0_i32 = arith.constant 0 : i32
    %8 = vector.broadcast %c0_i32 : i32 to vector<1x128xi32>
    %9 = arith.cmpi sgt, %7, %8 : vector<1x128xi32>
    %10 = arith.extui %9 : vector<1x128xi1> to vector<1x128xi32>
    %11 = arith.sitofp %10 : vector<1x128xi32> to vector<1x128xf32>
    %12 = arith.subf %1, %3 : vector<4x128xf32>
    %13 = math.absf %12 : vector<4x128xf32>
    %cst = arith.constant 1.000000e+00 : f32
    %14 = vector.broadcast %cst : f32 to vector<4x128xf32>
    %15 = arith.cmpf olt, %13, %14 : vector<4x128xf32>
    %cst_11 = arith.constant 5.000000e-01 : f32
    %16 = vector.broadcast %cst_11 : f32 to vector<4x128xf32>
    %17 = arith.mulf %16, %12 : vector<4x128xf32>
    %18 = arith.mulf %17, %12 : vector<4x128xf32>
    %cst_12 = arith.constant 5.000000e-01 : f32
    %19 = vector.broadcast %cst_12 : f32 to vector<4x128xf32>
    %20 = arith.subf %13, %19 : vector<4x128xf32>
    %21 = arith.select %15, %18, %20 : vector<4x128xi1>, vector<4x128xf32>
    %cst_13 = arith.constant dense<0.000000e+00> : vector<128xf32>
    %22 = vector.multi_reduction <add>, %21, %cst_13 [0] : vector<4x128xf32> to vector<128xf32>
    %23 = vector.shape_cast %22 : vector<128xf32> to vector<1x128xf32>
    %24 = arith.mulf %23, %11 : vector<1x128xf32>
    %cst_14 = arith.constant dense<0.000000e+00> : vector<1xf32>
    %25 = vector.multi_reduction <add>, %24, %cst_14 [1] : vector<1x128xf32> to vector<1xf32>
    %26 = vector.shape_cast %25 : vector<1xf32> to vector<1x1xf32>
    %cst_15 = arith.constant dense<0xFF800000> : vector<128xf32>
    %27 = vector.multi_reduction <maximumf>, %5, %cst_15 [0] : vector<8x128xf32> to vector<128xf32>
    %28 = vector.shape_cast %27 : vector<128xf32> to vector<1x128xf32>
    %29 = vector.broadcast %28 : vector<1x128xf32> to vector<8x128xf32>
    %30 = arith.subf %5, %29 : vector<8x128xf32>
    %31 = math.exp %30 : vector<8x128xf32>
    %cst_16 = arith.constant dense<0.000000e+00> : vector<128xf32>
    %32 = vector.multi_reduction <add>, %31, %cst_16 [0] : vector<8x128xf32> to vector<128xf32>
    %33 = vector.shape_cast %32 : vector<128xf32> to vector<1x128xf32>
    %34 = math.log %33 : vector<1x128xf32>
    %35 = arith.addf %34, %28 : vector<1x128xf32>
    %36 = tpu.iota {dimensions = array<i32: 0>} : vector<8x128xi32>
    %37 = vector.broadcast %7 : vector<1x128xi32> to vector<8x128xi32>
    %38 = arith.cmpi eq, %36, %37 : vector<8x128xi32>
    %cst_17 = arith.constant 0.000000e+00 : f32
    %39 = vector.broadcast %cst_17 : f32 to vector<8x128xf32>
    %40 = arith.select %38, %5, %39 : vector<8x128xi1>, vector<8x128xf32>
    %cst_18 = arith.constant dense<0.000000e+00> : vector<128xf32>
    %41 = vector.multi_reduction <add>, %40, %cst_18 [0] : vector<8x128xf32> to vector<128xf32>
    %42 = vector.shape_cast %41 : vector<128xf32> to vector<1x128xf32>
    %43 = arith.subf %35, %42 : vector<1x128xf32>
    %44 = arith.mulf %43, %11 : vector<1x128xf32>
    %cst_19 = arith.constant dense<0.000000e+00> : vector<1xf32>
    %45 = vector.multi_reduction <add>, %44, %cst_19 [1] : vector<1x128xf32> to vector<1xf32>
    %46 = vector.shape_cast %45 : vector<1xf32> to vector<1x1xf32>
    %cst_20 = arith.constant dense<0.000000e+00> : vector<1xf32>
    %47 = vector.multi_reduction <add>, %11, %cst_20 [1] : vector<1x128xf32> to vector<1xf32>
    %48 = vector.shape_cast %47 : vector<1xf32> to vector<1x1xf32>
    %cst_21 = arith.constant 0.000000e+00 : f32
    %49 = vector.broadcast %cst_21 : f32 to vector<1x128xf32>
    %50 = arith.select %9, %49, %43 : vector<1x128xi1>, vector<1x128xf32>
    %51 = arith.fptosi %48 : vector<1x1xf32> to vector<1x1xi32>
    %c3_i32 = arith.constant 3 : i32
    %52 = vector.broadcast %c3_i32 : i32 to vector<1x1xi32>
    %53 = arith.muli %52, %51 : vector<1x1xi32>
    %c127_i32 = arith.constant 127 : i32
    %54 = vector.broadcast %c127_i32 : i32 to vector<1x1xi32>
    %55 = arith.minsi %53, %54 : vector<1x1xi32>
    %56 = arith.sitofp %55 : vector<1x1xi32> to vector<1x1xf32>
    %57 = tpu.bitcast %50 : vector<1x128xf32> -> vector<1x128xi32>
    %c0_i32_22 = arith.constant 0 : i32
    %58 = vector.broadcast %c0_i32_22 : i32 to vector<1x1xi32>
    %c1073741824_i32 = arith.constant 1073741824 : i32
    %59 = vector.broadcast %c1073741824_i32 : i32 to vector<1x1xi32>
    %60 = arith.ori %58, %59 : vector<1x1xi32>
    %61 = vector.broadcast %60 : vector<1x1xi32> to vector<1x128xi32>
    %62 = arith.cmpi sge, %57, %61 : vector<1x128xi32>
    %63 = arith.extui %62 : vector<1x128xi1> to vector<1x128xi32>
    %64 = arith.sitofp %63 : vector<1x128xi32> to vector<1x128xf32>
    %cst_23 = arith.constant dense<0.000000e+00> : vector<1xf32>
    %65 = vector.multi_reduction <add>, %64, %cst_23 [1] : vector<1x128xf32> to vector<1xf32>
    %66 = vector.shape_cast %65 : vector<1xf32> to vector<1x1xf32>
    %67 = arith.cmpf oge, %66, %56 : vector<1x1xf32>
    %68 = arith.select %67, %60, %58 : vector<1x1xi1>, vector<1x1xi32>
    %c536870912_i32 = arith.constant 536870912 : i32
    %69 = vector.broadcast %c536870912_i32 : i32 to vector<1x1xi32>
    %70 = arith.ori %68, %69 : vector<1x1xi32>
    %71 = vector.broadcast %70 : vector<1x1xi32> to vector<1x128xi32>
    %72 = arith.cmpi sge, %57, %71 : vector<1x128xi32>
    %73 = arith.extui %72 : vector<1x128xi1> to vector<1x128xi32>
    %74 = arith.sitofp %73 : vector<1x128xi32> to vector<1x128xf32>
    %cst_24 = arith.constant dense<0.000000e+00> : vector<1xf32>
    %75 = vector.multi_reduction <add>, %74, %cst_24 [1] : vector<1x128xf32> to vector<1xf32>
    %76 = vector.shape_cast %75 : vector<1xf32> to vector<1x1xf32>
    %77 = arith.cmpf oge, %76, %56 : vector<1x1xf32>
    %78 = arith.select %77, %70, %68 : vector<1x1xi1>, vector<1x1xi32>
    %c268435456_i32 = arith.constant 268435456 : i32
    %79 = vector.broadcast %c268435456_i32 : i32 to vector<1x1xi32>
    %80 = arith.ori %78, %79 : vector<1x1xi32>
    %81 = vector.broadcast %80 : vector<1x1xi32> to vector<1x128xi32>
    %82 = arith.cmpi sge, %57, %81 : vector<1x128xi32>
    %83 = arith.extui %82 : vector<1x128xi1> to vector<1x128xi32>
    %84 = arith.sitofp %83 : vector<1x128xi32> to vector<1x128xf32>
    %cst_25 = arith.constant dense<0.000000e+00> : vector<1xf32>
    %85 = vector.multi_reduction <add>, %84, %cst_25 [1] : vector<1x128xf32> to vector<1xf32>
    %86 = vector.shape_cast %85 : vector<1xf32> to vector<1x1xf32>
    %87 = arith.cmpf oge, %86, %56 : vector<1x1xf32>
    %88 = arith.select %87, %80, %78 : vector<1x1xi1>, vector<1x1xi32>
    %c134217728_i32 = arith.constant 134217728 : i32
    %89 = vector.broadcast %c134217728_i32 : i32 to vector<1x1xi32>
    %90 = arith.ori %88, %89 : vector<1x1xi32>
    %91 = vector.broadcast %90 : vector<1x1xi32> to vector<1x128xi32>
    %92 = arith.cmpi sge, %57, %91 : vector<1x128xi32>
    %93 = arith.extui %92 : vector<1x128xi1> to vector<1x128xi32>
    %94 = arith.sitofp %93 : vector<1x128xi32> to vector<1x128xf32>
    %cst_26 = arith.constant dense<0.000000e+00> : vector<1xf32>
    %95 = vector.multi_reduction <add>, %94, %cst_26 [1] : vector<1x128xf32> to vector<1xf32>
    %96 = vector.shape_cast %95 : vector<1xf32> to vector<1x1xf32>
    %97 = arith.cmpf oge, %96, %56 : vector<1x1xf32>
    %98 = arith.select %97, %90, %88 : vector<1x1xi1>, vector<1x1xi32>
    %c67108864_i32 = arith.constant 67108864 : i32
    %99 = vector.broadcast %c67108864_i32 : i32 to vector<1x1xi32>
    %100 = arith.ori %98, %99 : vector<1x1xi32>
    %101 = vector.broadcast %100 : vector<1x1xi32> to vector<1x128xi32>
    %102 = arith.cmpi sge, %57, %101 : vector<1x128xi32>
    %103 = arith.extui %102 : vector<1x128xi1> to vector<1x128xi32>
    %104 = arith.sitofp %103 : vector<1x128xi32> to vector<1x128xf32>
    %cst_27 = arith.constant dense<0.000000e+00> : vector<1xf32>
    %105 = vector.multi_reduction <add>, %104, %cst_27 [1] : vector<1x128xf32> to vector<1xf32>
    %106 = vector.shape_cast %105 : vector<1xf32> to vector<1x1xf32>
    %107 = arith.cmpf oge, %106, %56 : vector<1x1xf32>
    %108 = arith.select %107, %100, %98 : vector<1x1xi1>, vector<1x1xi32>
    %c33554432_i32 = arith.constant 33554432 : i32
    %109 = vector.broadcast %c33554432_i32 : i32 to vector<1x1xi32>
    %110 = arith.ori %108, %109 : vector<1x1xi32>
    %111 = vector.broadcast %110 : vector<1x1xi32> to vector<1x128xi32>
    %112 = arith.cmpi sge, %57, %111 : vector<1x128xi32>
    %113 = arith.extui %112 : vector<1x128xi1> to vector<1x128xi32>
    %114 = arith.sitofp %113 : vector<1x128xi32> to vector<1x128xf32>
    %cst_28 = arith.constant dense<0.000000e+00> : vector<1xf32>
    %115 = vector.multi_reduction <add>, %114, %cst_28 [1] : vector<1x128xf32> to vector<1xf32>
    %116 = vector.shape_cast %115 : vector<1xf32> to vector<1x1xf32>
    %117 = arith.cmpf oge, %116, %56 : vector<1x1xf32>
    %118 = arith.select %117, %110, %108 : vector<1x1xi1>, vector<1x1xi32>
    %c16777216_i32 = arith.constant 16777216 : i32
    %119 = vector.broadcast %c16777216_i32 : i32 to vector<1x1xi32>
    %120 = arith.ori %118, %119 : vector<1x1xi32>
    %121 = vector.broadcast %120 : vector<1x1xi32> to vector<1x128xi32>
    %122 = arith.cmpi sge, %57, %121 : vector<1x128xi32>
    %123 = arith.extui %122 : vector<1x128xi1> to vector<1x128xi32>
    %124 = arith.sitofp %123 : vector<1x128xi32> to vector<1x128xf32>
    %cst_29 = arith.constant dense<0.000000e+00> : vector<1xf32>
    %125 = vector.multi_reduction <add>, %124, %cst_29 [1] : vector<1x128xf32> to vector<1xf32>
    %126 = vector.shape_cast %125 : vector<1xf32> to vector<1x1xf32>
    %127 = arith.cmpf oge, %126, %56 : vector<1x1xf32>
    %128 = arith.select %127, %120, %118 : vector<1x1xi1>, vector<1x1xi32>
    %c8388608_i32 = arith.constant 8388608 : i32
    %129 = vector.broadcast %c8388608_i32 : i32 to vector<1x1xi32>
    %130 = arith.ori %128, %129 : vector<1x1xi32>
    %131 = vector.broadcast %130 : vector<1x1xi32> to vector<1x128xi32>
    %132 = arith.cmpi sge, %57, %131 : vector<1x128xi32>
    %133 = arith.extui %132 : vector<1x128xi1> to vector<1x128xi32>
    %134 = arith.sitofp %133 : vector<1x128xi32> to vector<1x128xf32>
    %cst_30 = arith.constant dense<0.000000e+00> : vector<1xf32>
    %135 = vector.multi_reduction <add>, %134, %cst_30 [1] : vector<1x128xf32> to vector<1xf32>
    %136 = vector.shape_cast %135 : vector<1xf32> to vector<1x1xf32>
    %137 = arith.cmpf oge, %136, %56 : vector<1x1xf32>
    %138 = arith.select %137, %130, %128 : vector<1x1xi1>, vector<1x1xi32>
    %c4194304_i32 = arith.constant 4194304 : i32
    %139 = vector.broadcast %c4194304_i32 : i32 to vector<1x1xi32>
    %140 = arith.ori %138, %139 : vector<1x1xi32>
    %141 = vector.broadcast %140 : vector<1x1xi32> to vector<1x128xi32>
    %142 = arith.cmpi sge, %57, %141 : vector<1x128xi32>
    %143 = arith.extui %142 : vector<1x128xi1> to vector<1x128xi32>
    %144 = arith.sitofp %143 : vector<1x128xi32> to vector<1x128xf32>
    %cst_31 = arith.constant dense<0.000000e+00> : vector<1xf32>
    %145 = vector.multi_reduction <add>, %144, %cst_31 [1] : vector<1x128xf32> to vector<1xf32>
    %146 = vector.shape_cast %145 : vector<1xf32> to vector<1x1xf32>
    %147 = arith.cmpf oge, %146, %56 : vector<1x1xf32>
    %148 = arith.select %147, %140, %138 : vector<1x1xi1>, vector<1x1xi32>
    %c2097152_i32 = arith.constant 2097152 : i32
    %149 = vector.broadcast %c2097152_i32 : i32 to vector<1x1xi32>
    %150 = arith.ori %148, %149 : vector<1x1xi32>
    %151 = vector.broadcast %150 : vector<1x1xi32> to vector<1x128xi32>
    %152 = arith.cmpi sge, %57, %151 : vector<1x128xi32>
    %153 = arith.extui %152 : vector<1x128xi1> to vector<1x128xi32>
    %154 = arith.sitofp %153 : vector<1x128xi32> to vector<1x128xf32>
    %cst_32 = arith.constant dense<0.000000e+00> : vector<1xf32>
    %155 = vector.multi_reduction <add>, %154, %cst_32 [1] : vector<1x128xf32> to vector<1xf32>
    %156 = vector.shape_cast %155 : vector<1xf32> to vector<1x1xf32>
    %157 = arith.cmpf oge, %156, %56 : vector<1x1xf32>
    %158 = arith.select %157, %150, %148 : vector<1x1xi1>, vector<1x1xi32>
    %c1048576_i32 = arith.constant 1048576 : i32
    %159 = vector.broadcast %c1048576_i32 : i32 to vector<1x1xi32>
    %160 = arith.ori %158, %159 : vector<1x1xi32>
    %161 = vector.broadcast %160 : vector<1x1xi32> to vector<1x128xi32>
    %162 = arith.cmpi sge, %57, %161 : vector<1x128xi32>
    %163 = arith.extui %162 : vector<1x128xi1> to vector<1x128xi32>
    %164 = arith.sitofp %163 : vector<1x128xi32> to vector<1x128xf32>
    %cst_33 = arith.constant dense<0.000000e+00> : vector<1xf32>
    %165 = vector.multi_reduction <add>, %164, %cst_33 [1] : vector<1x128xf32> to vector<1xf32>
    %166 = vector.shape_cast %165 : vector<1xf32> to vector<1x1xf32>
    %167 = arith.cmpf oge, %166, %56 : vector<1x1xf32>
    %168 = arith.select %167, %160, %158 : vector<1x1xi1>, vector<1x1xi32>
    %c524288_i32 = arith.constant 524288 : i32
    %169 = vector.broadcast %c524288_i32 : i32 to vector<1x1xi32>
    %170 = arith.ori %168, %169 : vector<1x1xi32>
    %171 = vector.broadcast %170 : vector<1x1xi32> to vector<1x128xi32>
    %172 = arith.cmpi sge, %57, %171 : vector<1x128xi32>
    %173 = arith.extui %172 : vector<1x128xi1> to vector<1x128xi32>
    %174 = arith.sitofp %173 : vector<1x128xi32> to vector<1x128xf32>
    %cst_34 = arith.constant dense<0.000000e+00> : vector<1xf32>
    %175 = vector.multi_reduction <add>, %174, %cst_34 [1] : vector<1x128xf32> to vector<1xf32>
    %176 = vector.shape_cast %175 : vector<1xf32> to vector<1x1xf32>
    %177 = arith.cmpf oge, %176, %56 : vector<1x1xf32>
    %178 = arith.select %177, %170, %168 : vector<1x1xi1>, vector<1x1xi32>
    %c262144_i32 = arith.constant 262144 : i32
    %179 = vector.broadcast %c262144_i32 : i32 to vector<1x1xi32>
    %180 = arith.ori %178, %179 : vector<1x1xi32>
    %181 = vector.broadcast %180 : vector<1x1xi32> to vector<1x128xi32>
    %182 = arith.cmpi sge, %57, %181 : vector<1x128xi32>
    %183 = arith.extui %182 : vector<1x128xi1> to vector<1x128xi32>
    %184 = arith.sitofp %183 : vector<1x128xi32> to vector<1x128xf32>
    %cst_35 = arith.constant dense<0.000000e+00> : vector<1xf32>
    %185 = vector.multi_reduction <add>, %184, %cst_35 [1] : vector<1x128xf32> to vector<1xf32>
    %186 = vector.shape_cast %185 : vector<1xf32> to vector<1x1xf32>
    %187 = arith.cmpf oge, %186, %56 : vector<1x1xf32>
    %188 = arith.select %187, %180, %178 : vector<1x1xi1>, vector<1x1xi32>
    %c131072_i32 = arith.constant 131072 : i32
    %189 = vector.broadcast %c131072_i32 : i32 to vector<1x1xi32>
    %190 = arith.ori %188, %189 : vector<1x1xi32>
    %191 = vector.broadcast %190 : vector<1x1xi32> to vector<1x128xi32>
    %192 = arith.cmpi sge, %57, %191 : vector<1x128xi32>
    %193 = arith.extui %192 : vector<1x128xi1> to vector<1x128xi32>
    %194 = arith.sitofp %193 : vector<1x128xi32> to vector<1x128xf32>
    %cst_36 = arith.constant dense<0.000000e+00> : vector<1xf32>
    %195 = vector.multi_reduction <add>, %194, %cst_36 [1] : vector<1x128xf32> to vector<1xf32>
    %196 = vector.shape_cast %195 : vector<1xf32> to vector<1x1xf32>
    %197 = arith.cmpf oge, %196, %56 : vector<1x1xf32>
    %198 = arith.select %197, %190, %188 : vector<1x1xi1>, vector<1x1xi32>
    %c65536_i32 = arith.constant 65536 : i32
    %199 = vector.broadcast %c65536_i32 : i32 to vector<1x1xi32>
    %200 = arith.ori %198, %199 : vector<1x1xi32>
    %201 = vector.broadcast %200 : vector<1x1xi32> to vector<1x128xi32>
    %202 = arith.cmpi sge, %57, %201 : vector<1x128xi32>
    %203 = arith.extui %202 : vector<1x128xi1> to vector<1x128xi32>
    %204 = arith.sitofp %203 : vector<1x128xi32> to vector<1x128xf32>
    %cst_37 = arith.constant dense<0.000000e+00> : vector<1xf32>
    %205 = vector.multi_reduction <add>, %204, %cst_37 [1] : vector<1x128xf32> to vector<1xf32>
    %206 = vector.shape_cast %205 : vector<1xf32> to vector<1x1xf32>
    %207 = arith.cmpf oge, %206, %56 : vector<1x1xf32>
    %208 = arith.select %207, %200, %198 : vector<1x1xi1>, vector<1x1xi32>
    %c32768_i32 = arith.constant 32768 : i32
    %209 = vector.broadcast %c32768_i32 : i32 to vector<1x1xi32>
    %210 = arith.ori %208, %209 : vector<1x1xi32>
    %211 = vector.broadcast %210 : vector<1x1xi32> to vector<1x128xi32>
    %212 = arith.cmpi sge, %57, %211 : vector<1x128xi32>
    %213 = arith.extui %212 : vector<1x128xi1> to vector<1x128xi32>
    %214 = arith.sitofp %213 : vector<1x128xi32> to vector<1x128xf32>
    %cst_38 = arith.constant dense<0.000000e+00> : vector<1xf32>
    %215 = vector.multi_reduction <add>, %214, %cst_38 [1] : vector<1x128xf32> to vector<1xf32>
    %216 = vector.shape_cast %215 : vector<1xf32> to vector<1x1xf32>
    %217 = arith.cmpf oge, %216, %56 : vector<1x1xf32>
    %218 = arith.select %217, %210, %208 : vector<1x1xi1>, vector<1x1xi32>
    %c16384_i32 = arith.constant 16384 : i32
    %219 = vector.broadcast %c16384_i32 : i32 to vector<1x1xi32>
    %220 = arith.ori %218, %219 : vector<1x1xi32>
    %221 = vector.broadcast %220 : vector<1x1xi32> to vector<1x128xi32>
    %222 = arith.cmpi sge, %57, %221 : vector<1x128xi32>
    %223 = arith.extui %222 : vector<1x128xi1> to vector<1x128xi32>
    %224 = arith.sitofp %223 : vector<1x128xi32> to vector<1x128xf32>
    %cst_39 = arith.constant dense<0.000000e+00> : vector<1xf32>
    %225 = vector.multi_reduction <add>, %224, %cst_39 [1] : vector<1x128xf32> to vector<1xf32>
    %226 = vector.shape_cast %225 : vector<1xf32> to vector<1x1xf32>
    %227 = arith.cmpf oge, %226, %56 : vector<1x1xf32>
    %228 = arith.select %227, %220, %218 : vector<1x1xi1>, vector<1x1xi32>
    %c8192_i32 = arith.constant 8192 : i32
    %229 = vector.broadcast %c8192_i32 : i32 to vector<1x1xi32>
    %230 = arith.ori %228, %229 : vector<1x1xi32>
    %231 = vector.broadcast %230 : vector<1x1xi32> to vector<1x128xi32>
    %232 = arith.cmpi sge, %57, %231 : vector<1x128xi32>
    %233 = arith.extui %232 : vector<1x128xi1> to vector<1x128xi32>
    %234 = arith.sitofp %233 : vector<1x128xi32> to vector<1x128xf32>
    %cst_40 = arith.constant dense<0.000000e+00> : vector<1xf32>
    %235 = vector.multi_reduction <add>, %234, %cst_40 [1] : vector<1x128xf32> to vector<1xf32>
    %236 = vector.shape_cast %235 : vector<1xf32> to vector<1x1xf32>
    %237 = arith.cmpf oge, %236, %56 : vector<1x1xf32>
    %238 = arith.select %237, %230, %228 : vector<1x1xi1>, vector<1x1xi32>
    %c4096_i32 = arith.constant 4096 : i32
    %239 = vector.broadcast %c4096_i32 : i32 to vector<1x1xi32>
    %240 = arith.ori %238, %239 : vector<1x1xi32>
    %241 = vector.broadcast %240 : vector<1x1xi32> to vector<1x128xi32>
    %242 = arith.cmpi sge, %57, %241 : vector<1x128xi32>
    %243 = arith.extui %242 : vector<1x128xi1> to vector<1x128xi32>
    %244 = arith.sitofp %243 : vector<1x128xi32> to vector<1x128xf32>
    %cst_41 = arith.constant dense<0.000000e+00> : vector<1xf32>
    %245 = vector.multi_reduction <add>, %244, %cst_41 [1] : vector<1x128xf32> to vector<1xf32>
    %246 = vector.shape_cast %245 : vector<1xf32> to vector<1x1xf32>
    %247 = arith.cmpf oge, %246, %56 : vector<1x1xf32>
    %248 = arith.select %247, %240, %238 : vector<1x1xi1>, vector<1x1xi32>
    %c2048_i32 = arith.constant 2048 : i32
    %249 = vector.broadcast %c2048_i32 : i32 to vector<1x1xi32>
    %250 = arith.ori %248, %249 : vector<1x1xi32>
    %251 = vector.broadcast %250 : vector<1x1xi32> to vector<1x128xi32>
    %252 = arith.cmpi sge, %57, %251 : vector<1x128xi32>
    %253 = arith.extui %252 : vector<1x128xi1> to vector<1x128xi32>
    %254 = arith.sitofp %253 : vector<1x128xi32> to vector<1x128xf32>
    %cst_42 = arith.constant dense<0.000000e+00> : vector<1xf32>
    %255 = vector.multi_reduction <add>, %254, %cst_42 [1] : vector<1x128xf32> to vector<1xf32>
    %256 = vector.shape_cast %255 : vector<1xf32> to vector<1x1xf32>
    %257 = arith.cmpf oge, %256, %56 : vector<1x1xf32>
    %258 = arith.select %257, %250, %248 : vector<1x1xi1>, vector<1x1xi32>
    %c1024_i32 = arith.constant 1024 : i32
    %259 = vector.broadcast %c1024_i32 : i32 to vector<1x1xi32>
    %260 = arith.ori %258, %259 : vector<1x1xi32>
    %261 = vector.broadcast %260 : vector<1x1xi32> to vector<1x128xi32>
    %262 = arith.cmpi sge, %57, %261 : vector<1x128xi32>
    %263 = arith.extui %262 : vector<1x128xi1> to vector<1x128xi32>
    %264 = arith.sitofp %263 : vector<1x128xi32> to vector<1x128xf32>
    %cst_43 = arith.constant dense<0.000000e+00> : vector<1xf32>
    %265 = vector.multi_reduction <add>, %264, %cst_43 [1] : vector<1x128xf32> to vector<1xf32>
    %266 = vector.shape_cast %265 : vector<1xf32> to vector<1x1xf32>
    %267 = arith.cmpf oge, %266, %56 : vector<1x1xf32>
    %268 = arith.select %267, %260, %258 : vector<1x1xi1>, vector<1x1xi32>
    %c512_i32 = arith.constant 512 : i32
    %269 = vector.broadcast %c512_i32 : i32 to vector<1x1xi32>
    %270 = arith.ori %268, %269 : vector<1x1xi32>
    %271 = vector.broadcast %270 : vector<1x1xi32> to vector<1x128xi32>
    %272 = arith.cmpi sge, %57, %271 : vector<1x128xi32>
    %273 = arith.extui %272 : vector<1x128xi1> to vector<1x128xi32>
    %274 = arith.sitofp %273 : vector<1x128xi32> to vector<1x128xf32>
    %cst_44 = arith.constant dense<0.000000e+00> : vector<1xf32>
    %275 = vector.multi_reduction <add>, %274, %cst_44 [1] : vector<1x128xf32> to vector<1xf32>
    %276 = vector.shape_cast %275 : vector<1xf32> to vector<1x1xf32>
    %277 = arith.cmpf oge, %276, %56 : vector<1x1xf32>
    %278 = arith.select %277, %270, %268 : vector<1x1xi1>, vector<1x1xi32>
    %c256_i32 = arith.constant 256 : i32
    %279 = vector.broadcast %c256_i32 : i32 to vector<1x1xi32>
    %280 = arith.ori %278, %279 : vector<1x1xi32>
    %281 = vector.broadcast %280 : vector<1x1xi32> to vector<1x128xi32>
    %282 = arith.cmpi sge, %57, %281 : vector<1x128xi32>
    %283 = arith.extui %282 : vector<1x128xi1> to vector<1x128xi32>
    %284 = arith.sitofp %283 : vector<1x128xi32> to vector<1x128xf32>
    %cst_45 = arith.constant dense<0.000000e+00> : vector<1xf32>
    %285 = vector.multi_reduction <add>, %284, %cst_45 [1] : vector<1x128xf32> to vector<1xf32>
    %286 = vector.shape_cast %285 : vector<1xf32> to vector<1x1xf32>
    %287 = arith.cmpf oge, %286, %56 : vector<1x1xf32>
    %288 = arith.select %287, %280, %278 : vector<1x1xi1>, vector<1x1xi32>
    %c128_i32 = arith.constant 128 : i32
    %289 = vector.broadcast %c128_i32 : i32 to vector<1x1xi32>
    %290 = arith.ori %288, %289 : vector<1x1xi32>
    %291 = vector.broadcast %290 : vector<1x1xi32> to vector<1x128xi32>
    %292 = arith.cmpi sge, %57, %291 : vector<1x128xi32>
    %293 = arith.extui %292 : vector<1x128xi1> to vector<1x128xi32>
    %294 = arith.sitofp %293 : vector<1x128xi32> to vector<1x128xf32>
    %cst_46 = arith.constant dense<0.000000e+00> : vector<1xf32>
    %295 = vector.multi_reduction <add>, %294, %cst_46 [1] : vector<1x128xf32> to vector<1xf32>
    %296 = vector.shape_cast %295 : vector<1xf32> to vector<1x1xf32>
    %297 = arith.cmpf oge, %296, %56 : vector<1x1xf32>
    %298 = arith.select %297, %290, %288 : vector<1x1xi1>, vector<1x1xi32>
    %c64_i32 = arith.constant 64 : i32
    %299 = vector.broadcast %c64_i32 : i32 to vector<1x1xi32>
    %300 = arith.ori %298, %299 : vector<1x1xi32>
    %301 = vector.broadcast %300 : vector<1x1xi32> to vector<1x128xi32>
    %302 = arith.cmpi sge, %57, %301 : vector<1x128xi32>
    %303 = arith.extui %302 : vector<1x128xi1> to vector<1x128xi32>
    %304 = arith.sitofp %303 : vector<1x128xi32> to vector<1x128xf32>
    %cst_47 = arith.constant dense<0.000000e+00> : vector<1xf32>
    %305 = vector.multi_reduction <add>, %304, %cst_47 [1] : vector<1x128xf32> to vector<1xf32>
    %306 = vector.shape_cast %305 : vector<1xf32> to vector<1x1xf32>
    %307 = arith.cmpf oge, %306, %56 : vector<1x1xf32>
    %308 = arith.select %307, %300, %298 : vector<1x1xi1>, vector<1x1xi32>
    %c32_i32 = arith.constant 32 : i32
    %309 = vector.broadcast %c32_i32 : i32 to vector<1x1xi32>
    %310 = arith.ori %308, %309 : vector<1x1xi32>
    %311 = vector.broadcast %310 : vector<1x1xi32> to vector<1x128xi32>
    %312 = arith.cmpi sge, %57, %311 : vector<1x128xi32>
    %313 = arith.extui %312 : vector<1x128xi1> to vector<1x128xi32>
    %314 = arith.sitofp %313 : vector<1x128xi32> to vector<1x128xf32>
    %cst_48 = arith.constant dense<0.000000e+00> : vector<1xf32>
    %315 = vector.multi_reduction <add>, %314, %cst_48 [1] : vector<1x128xf32> to vector<1xf32>
    %316 = vector.shape_cast %315 : vector<1xf32> to vector<1x1xf32>
    %317 = arith.cmpf oge, %316, %56 : vector<1x1xf32>
    %318 = arith.select %317, %310, %308 : vector<1x1xi1>, vector<1x1xi32>
    %c16_i32 = arith.constant 16 : i32
    %319 = vector.broadcast %c16_i32 : i32 to vector<1x1xi32>
    %320 = arith.ori %318, %319 : vector<1x1xi32>
    %321 = vector.broadcast %320 : vector<1x1xi32> to vector<1x128xi32>
    %322 = arith.cmpi sge, %57, %321 : vector<1x128xi32>
    %323 = arith.extui %322 : vector<1x128xi1> to vector<1x128xi32>
    %324 = arith.sitofp %323 : vector<1x128xi32> to vector<1x128xf32>
    %cst_49 = arith.constant dense<0.000000e+00> : vector<1xf32>
    %325 = vector.multi_reduction <add>, %324, %cst_49 [1] : vector<1x128xf32> to vector<1xf32>
    %326 = vector.shape_cast %325 : vector<1xf32> to vector<1x1xf32>
    %327 = arith.cmpf oge, %326, %56 : vector<1x1xf32>
    %328 = arith.select %327, %320, %318 : vector<1x1xi1>, vector<1x1xi32>
    %c8_i32 = arith.constant 8 : i32
    %329 = vector.broadcast %c8_i32 : i32 to vector<1x1xi32>
    %330 = arith.ori %328, %329 : vector<1x1xi32>
    %331 = vector.broadcast %330 : vector<1x1xi32> to vector<1x128xi32>
    %332 = arith.cmpi sge, %57, %331 : vector<1x128xi32>
    %333 = arith.extui %332 : vector<1x128xi1> to vector<1x128xi32>
    %334 = arith.sitofp %333 : vector<1x128xi32> to vector<1x128xf32>
    %cst_50 = arith.constant dense<0.000000e+00> : vector<1xf32>
    %335 = vector.multi_reduction <add>, %334, %cst_50 [1] : vector<1x128xf32> to vector<1xf32>
    %336 = vector.shape_cast %335 : vector<1xf32> to vector<1x1xf32>
    %337 = arith.cmpf oge, %336, %56 : vector<1x1xf32>
    %338 = arith.select %337, %330, %328 : vector<1x1xi1>, vector<1x1xi32>
    %c4_i32 = arith.constant 4 : i32
    %339 = vector.broadcast %c4_i32 : i32 to vector<1x1xi32>
    %340 = arith.ori %338, %339 : vector<1x1xi32>
    %341 = vector.broadcast %340 : vector<1x1xi32> to vector<1x128xi32>
    %342 = arith.cmpi sge, %57, %341 : vector<1x128xi32>
    %343 = arith.extui %342 : vector<1x128xi1> to vector<1x128xi32>
    %344 = arith.sitofp %343 : vector<1x128xi32> to vector<1x128xf32>
    %cst_51 = arith.constant dense<0.000000e+00> : vector<1xf32>
    %345 = vector.multi_reduction <add>, %344, %cst_51 [1] : vector<1x128xf32> to vector<1xf32>
    %346 = vector.shape_cast %345 : vector<1xf32> to vector<1x1xf32>
    %347 = arith.cmpf oge, %346, %56 : vector<1x1xf32>
    %348 = arith.select %347, %340, %338 : vector<1x1xi1>, vector<1x1xi32>
    %c2_i32 = arith.constant 2 : i32
    %349 = vector.broadcast %c2_i32 : i32 to vector<1x1xi32>
    %350 = arith.ori %348, %349 : vector<1x1xi32>
    %351 = vector.broadcast %350 : vector<1x1xi32> to vector<1x128xi32>
    %352 = arith.cmpi sge, %57, %351 : vector<1x128xi32>
    %353 = arith.extui %352 : vector<1x128xi1> to vector<1x128xi32>
    %354 = arith.sitofp %353 : vector<1x128xi32> to vector<1x128xf32>
    %cst_52 = arith.constant dense<0.000000e+00> : vector<1xf32>
    %355 = vector.multi_reduction <add>, %354, %cst_52 [1] : vector<1x128xf32> to vector<1xf32>
    %356 = vector.shape_cast %355 : vector<1xf32> to vector<1x1xf32>
    %357 = arith.cmpf oge, %356, %56 : vector<1x1xf32>
    %358 = arith.select %357, %350, %348 : vector<1x1xi1>, vector<1x1xi32>
    %c1_i32 = arith.constant 1 : i32
    %359 = vector.broadcast %c1_i32 : i32 to vector<1x1xi32>
    %360 = arith.ori %358, %359 : vector<1x1xi32>
    %361 = vector.broadcast %360 : vector<1x1xi32> to vector<1x128xi32>
    %362 = arith.cmpi sge, %57, %361 : vector<1x128xi32>
    %363 = arith.extui %362 : vector<1x128xi1> to vector<1x128xi32>
    %364 = arith.sitofp %363 : vector<1x128xi32> to vector<1x128xf32>
    %cst_53 = arith.constant dense<0.000000e+00> : vector<1xf32>
    %365 = vector.multi_reduction <add>, %364, %cst_53 [1] : vector<1x128xf32> to vector<1xf32>
    %366 = vector.shape_cast %365 : vector<1xf32> to vector<1x1xf32>
    %367 = arith.cmpf oge, %366, %56 : vector<1x1xf32>
    %368 = arith.select %367, %360, %358 : vector<1x1xi1>, vector<1x1xi32>
    %369 = tpu.bitcast %368 : vector<1x1xi32> -> vector<1x1xf32>
    %370 = vector.broadcast %368 : vector<1x1xi32> to vector<1x128xi32>
    %371 = arith.cmpi sgt, %57, %370 : vector<1x128xi32>
    %372 = arith.extui %371 : vector<1x128xi1> to vector<1x128xi32>
    %373 = arith.sitofp %372 : vector<1x128xi32> to vector<1x128xf32>
    %cst_54 = arith.constant dense<0.000000e+00> : vector<1xf32>
    %374 = vector.multi_reduction <add>, %373, %cst_54 [1] : vector<1x128xf32> to vector<1xf32>
    %375 = vector.shape_cast %374 : vector<1xf32> to vector<1x1xf32>
    %cst_55 = arith.constant 0.000000e+00 : f32
    %376 = vector.broadcast %cst_55 : f32 to vector<1x128xf32>
    %377 = arith.select %371, %50, %376 : vector<1x128xi1>, vector<1x128xf32>
    %cst_56 = arith.constant dense<0.000000e+00> : vector<1xf32>
    %378 = vector.multi_reduction <add>, %377, %cst_56 [1] : vector<1x128xf32> to vector<1xf32>
    %379 = vector.shape_cast %378 : vector<1xf32> to vector<1x1xf32>
    %cst_57 = arith.constant 0.000000e+00 : f32
    %380 = vector.broadcast %cst_57 : f32 to vector<1x1xf32>
    %381 = arith.cmpf ogt, %56, %380 : vector<1x1xf32>
    %382 = arith.subf %56, %375 : vector<1x1xf32>
    %383 = arith.mulf %382, %369 : vector<1x1xf32>
    %384 = arith.addf %379, %383 : vector<1x1xf32>
    %cst_58 = arith.constant 0.000000e+00 : f32
    %385 = vector.broadcast %cst_58 : f32 to vector<1x1xf32>
    %386 = arith.select %381, %384, %385 : vector<1x1xi1>, vector<1x1xf32>
    %387 = arith.addf %46, %386 : vector<1x1xf32>
    %c0_59 = arith.constant 0 : index
    %c0_60 = arith.constant 0 : index
    %c0_61 = arith.constant 0 : index
    %388 = vector.load %arg5[%c0_59, %c0_60, %c0_61] : memref<1x1x1xf32, #tpu.memory_space<vmem>>, vector<1x1x1xf32>
    %389 = vector.shape_cast %388 : vector<1x1x1xf32> to vector<1x1xf32>
    %390 = vector.shape_cast %26 : vector<1x1xf32> to vector<1x1x1xf32>
    tpu.vector_store %arg5[%c0_59, %c0_60, %c0_61], %390 {strides = array<i32>} : memref<1x1x1xf32, #tpu.memory_space<vmem>>, vector<1x1x1xf32>,
    %c0_62 = arith.constant 0 : index
    %c0_63 = arith.constant 0 : index
    %c0_64 = arith.constant 0 : index
    %391 = vector.load %arg6[%c0_62, %c0_63, %c0_64] : memref<1x1x1xf32, #tpu.memory_space<vmem>>, vector<1x1x1xf32>
    %392 = vector.shape_cast %391 : vector<1x1x1xf32> to vector<1x1xf32>
    %393 = vector.shape_cast %387 : vector<1x1xf32> to vector<1x1x1xf32>
    tpu.vector_store %arg6[%c0_62, %c0_63, %c0_64], %393 {strides = array<i32>} : memref<1x1x1xf32, #tpu.memory_space<vmem>>, vector<1x1x1xf32>,
    %c0_65 = arith.constant 0 : index
    %c0_66 = arith.constant 0 : index
    %c0_67 = arith.constant 0 : index
    %394 = vector.load %arg7[%c0_65, %c0_66, %c0_67] : memref<1x1x1xf32, #tpu.memory_space<vmem>>, vector<1x1x1xf32>
    %395 = vector.shape_cast %394 : vector<1x1x1xf32> to vector<1x1xf32>
    %396 = vector.shape_cast %48 : vector<1x1xf32> to vector<1x1x1xf32>
    tpu.vector_store %arg7[%c0_65, %c0_66, %c0_67], %396 {strides = array<i32>} : memref<1x1x1xf32, #tpu.memory_space<vmem>>, vector<1x1x1xf32>,
    return
  }
  func.func @transform_0(%arg0: i32) -> (i32, i32, i32) {
    %c0_i32 = arith.constant 0 : i32
    %c0_i32_0 = arith.constant 0 : i32
    %c0_i32_1 = arith.constant 0 : i32
    return %arg0, %c0_i32, %c0_i32_0 : i32, i32, i32
  }
  func.func @transform_1(%arg0: i32) -> (i32, i32, i32) {
    %c0_i32 = arith.constant 0 : i32
    %c0_i32_0 = arith.constant 0 : i32
    %c0_i32_1 = arith.constant 0 : i32
    return %arg0, %c0_i32, %c0_i32_0 : i32, i32, i32
  }
  func.func @transform_2(%arg0: i32) -> (i32, i32, i32) {
    %c0_i32 = arith.constant 0 : i32
    %c0_i32_0 = arith.constant 0 : i32
    %c0_i32_1 = arith.constant 0 : i32
    return %arg0, %c0_i32, %c0_i32_0 : i32, i32, i32
  }
  func.func @transform_3(%arg0: i32) -> (i32, i32, i32) {
    %c0_i32 = arith.constant 0 : i32
    %c0_i32_0 = arith.constant 0 : i32
    %c0_i32_1 = arith.constant 0 : i32
    return %arg0, %c0_i32, %c0_i32_0 : i32, i32, i32
  }
  func.func @transform_4(%arg0: i32) -> (i32, i32, i32) {
    %c0_i32 = arith.constant 0 : i32
    %c0_i32_0 = arith.constant 0 : i32
    %c0_i32_1 = arith.constant 0 : i32
    return %arg0, %c0_i32, %c0_i32_0 : i32, i32, i32
  }
  func.func @transform_5(%arg0: i32) -> (i32, i32, i32) {
    %c0_i32 = arith.constant 0 : i32
    %c0_i32_0 = arith.constant 0 : i32
    %c0_i32_1 = arith.constant 0 : i32
    return %arg0, %c0_i32, %c0_i32_0 : i32, i32, i32
  }
  func.func @transform_6(%arg0: i32) -> (i32, i32, i32) {
    %c0_i32 = arith.constant 0 : i32
    %c0_i32_0 = arith.constant 0 : i32
    %c0_i32_1 = arith.constant 0 : i32
    return %arg0, %c0_i32, %c0_i32_0 : i32, i32, i32
  }
}

</mosaic_0001>

<llo_original>
// kernel: tpu_custom_call.1
$region0: #{tpu_custom_call.1}
  #allocation0 [shape = 'u32[]', space=smem, size = 0x4, offset = 0x4, fixed_abs, tag = 'smem constant byte address 0x4 - core index']
  #allocation1 [shape = 'u32[144,128]{1,0:T(1,128)}', space=vmem, size = 0x12000, scoped, tag = 'internal scratch']
  %s0 = inlined_call_operand.hbm [shape: f32[2,4,128], index: 0, kind: input, shape index: {}]
  %s1 = inlined_call_operand.hbm [shape: f32[2,8,128], index: 1, kind: input, shape index: {}]
  %s2 = inlined_call_operand.hbm [shape: f32[2,4,128], index: 2, kind: input, shape index: {}]
  %s3 = inlined_call_operand.vmem [shape: s32[2,1,128], index: 3, kind: input, shape index: {}]
  %s4 = inlined_call_operand.vmem [shape: f32[2,1,1], index: 4, kind: output, shape index: {0}]
  %s5 = inlined_call_operand.vmem [shape: f32[2,1,1], index: 5, kind: output, shape index: {1}]
  %s6 = inlined_call_operand.vmem [shape: f32[2,1,1], index: 6, kind: output, shape index: {2}]
  %7 = xla_tuple %s4, %s5, %s6
  %s8 = sld [smem:[#allocation0]]
  $region77: #{tpu_custom_call.1} parent=0
    _
  %s10 = ssub.s32 1, %s8
  %s11 = scalar_select 0, %s10, %s8
  $region1: #{tpu_custom_call.1} parent=0
    #allocation2 [shape = 'u8[4096]{0}', space=vmem, size = 0x1000, scoped, tag = 'input window, operand 0']
    #allocation3 [shape = 's32[2]{0}', space=sflag, size = 0x8, scoped, tag = 'scoped memory for tpu_custom_call.1']
    #allocation4 [shape = 'u8[8192]{0}', space=vmem, size = 0x2000, scoped, tag = 'input window, operand 1']
    #allocation5 [shape = 's32[2]{0}', space=sflag, size = 0x8, scoped, tag = 'scoped memory for tpu_custom_call.1']
    #allocation6 [shape = 'u8[4096]{0}', space=vmem, size = 0x1000, scoped, tag = 'input window, operand 2']
    %12 = vsyncpa [#allocation3], 0
    %s13 = scalar_lea.sflag [#allocation3], 1
    %14 = vsyncpa %s13, 0
    %15 = vsyncpa [#allocation5], 0
    %s16 = scalar_lea.sflag [#allocation5], 1
    %17 = vsyncpa %s16, 0
    loop: start=0, step=1, limit=4
    $region2: #{tpu_custom_call.1} parent=1 // loop_pre_header
      _
    $region3: #{tpu_custom_call.1} parent=1 // loop_header
      %s19 = sphi 0, %s23
      %p20 = scmp.ge.s32.totalorder %s19, 4
      %s29 = sphi 0, %s31
      %s32 = sphi 0, %s29
      %s33 = sphi 0, %s32
      %s49 = sphi 0, %s33
      %s55 = sphi 0, %s57
      %s58 = sphi 0, %s55
      %s59 = sphi 0, %s58
      %s75 = sphi 0, %s59
      %s81 = sphi 0, %s83
      %s84 = sphi 0, %s81
      %s85 = sphi 0, %s84
      %s101 = sphi 0, %s85
      %s107 = sphi 0, %s109
      %s110 = sphi 0, %s107
      %s111 = sphi 0, %s110
      %s127 = sphi 0, %s111
      %s133 = sphi 0, %s135
      %s136 = sphi 0, %s133
      %s137 = sphi 0, %s136
      %s153 = sphi 0, %s137
      %s159 = sphi 0, %s161
      %s162 = sphi 0, %s159
      %s163 = sphi 0, %s162
      %s179 = sphi 0, %s163
      %s185 = sphi 0, %s187
      %s188 = sphi 0, %s185
      %s189 = sphi 0, %s188
      %s205 = sphi 0, %s189
    $region4: #{tpu_custom_call.1} parent=1 // loop_header_branch
      %22 = sbr.rel (%p20) target = $region8
    $region5: #{tpu_custom_call.1} parent=1 // loop_body
      %s24 = ssub.s32 %s19, 1
      %s25 = ssub.s32 %s19, 2
      %s26 = sadd.s32 %s19, 1
      %s27 = ssub.s32 %s19, %s26
      %p28 = scmp.eq.s32.totalorder %s27, 0
      %s30 = sadd.s32 %s29, 1
      %s31 = scalar_select %p28, %s29, %s30
      %p34 = pneg %p28
      %p35 = scmp.eq.s32.totalorder %s19, 1
      %p36 = por %p34, %p35
      %p37 = scmp.ne.s32.totalorder %s29, %s32
      %p38 = scmp.eq.s32.totalorder %s19, 0
      %p39 = por %p37, %p38
      %p40 = scmp.ne.s32.totalorder %s29, %s32
      %p41 = scmp.eq.s32.totalorder %s24, 1
      %p42 = por %p40, %p41
      %p43 = scmp.ne.s32.totalorder %s32, %s33
      %p44 = scmp.eq.s32.totalorder %s24, 0
      %p45 = por %p43, %p44
      %p46 = scmp.ne.s32.totalorder %s32, %s33
      %p47 = scmp.eq.s32.totalorder %s25, 1
      %p48 = por %p46, %p47
      %p50 = scmp.ne.s32.totalorder %s33, %s49
      %p51 = scmp.eq.s32.totalorder %s25, 0
      %p52 = por %p50, %p51
      %s53 = ssub.s32 %s19, %s26
      %p54 = scmp.eq.s32.totalorder %s53, 0
      %s56 = sadd.s32 %s55, 1
      %s57 = scalar_select %p54, %s55, %s56
      %p60 = pneg %p54
      %p61 = scmp.eq.s32.totalorder %s19, 1
      %p62 = por %p60, %p61
      %p63 = scmp.ne.s32.totalorder %s55, %s58
      %p64 = scmp.eq.s32.totalorder %s19, 0
      %p65 = por %p63, %p64
      %p66 = scmp.ne.s32.totalorder %s55, %s58
      %p67 = scmp.eq.s32.totalorder %s24, 1
      %p68 = por %p66, %p67
      %p69 = scmp.ne.s32.totalorder %s58, %s59
      %p70 = scmp.eq.s32.totalorder %s24, 0
      %p71 = por %p69, %p70
      %p72 = scmp.ne.s32.totalorder %s58, %s59
      %p73 = scmp.eq.s32.totalorder %s25, 1
      %p74 = por %p72, %p73
      %p76 = scmp.ne.s32.totalorder %s59, %s75
      %p77 = scmp.eq.s32.totalorder %s25, 0
      %p78 = por %p76, %p77
      %s79 = ssub.s32 %s19, %s26
      %p80 = scmp.eq.s32.totalorder %s79, 0
      %s82 = sadd.s32 %s81, 1
      %s83 = scalar_select %p80, %s81, %s82
      %p86 = pneg %p80
      %p87 = scmp.eq.s32.totalorder %s19, 1
      %p88 = por %p86, %p87
      %p89 = scmp.ne.s32.totalorder %s81, %s84
      %p90 = scmp.eq.s32.totalorder %s19, 0
      %p91 = por %p89, %p90
      %p92 = scmp.ne.s32.totalorder %s81, %s84
      %p93 = scmp.eq.s32.totalorder %s24, 1
      %p94 = por %p92, %p93
      %p95 = scmp.ne.s32.totalorder %s84, %s85
      %p96 = scmp.eq.s32.totalorder %s24, 0
      %p97 = por %p95, %p96
      %p98 = scmp.ne.s32.totalorder %s84, %s85
      %p99 = scmp.eq.s32.totalorder %s25, 1
      %p100 = por %p98, %p99
      %p102 = scmp.ne.s32.totalorder %s85, %s101
      %p103 = scmp.eq.s32.totalorder %s25, 0
      %p104 = por %p102, %p103
      %s105 = ssub.s32 %s19, %s26
      %p106 = scmp.eq.s32.totalorder %s105, 0
      %s108 = sadd.s32 %s107, 1
      %s109 = scalar_select %p106, %s107, %s108
      %p112 = pneg %p106
      %p113 = scmp.eq.s32.totalorder %s19, 1
      %p114 = por %p112, %p113
      %p115 = scmp.ne.s32.totalorder %s107, %s110
      %p116 = scmp.eq.s32.totalorder %s19, 0
      %p117 = por %p115, %p116
      %p118 = scmp.ne.s32.totalorder %s107, %s110
      %p119 = scmp.eq.s32.totalorder %s24, 1
      %p120 = por %p118, %p119
      %p121 = scmp.ne.s32.totalorder %s110, %s111
      %p122 = scmp.eq.s32.totalorder %s24, 0
      %p123 = por %p121, %p122
      %p124 = scmp.ne.s32.totalorder %s110, %s111
      %p125 = scmp.eq.s32.totalorder %s25, 1
      %p126 = por %p124, %p125
      %p128 = scmp.ne.s32.totalorder %s111, %s127
      %p129 = scmp.eq.s32.totalorder %s25, 0
      %p130 = por %p128, %p129
      %s131 = ssub.s32 %s19, %s26
      %p132 = scmp.eq.s32.totalorder %s131, 0
      %s134 = sadd.s32 %s133, 1
      %s135 = scalar_select %p132, %s133, %s134
      %p138 = pneg %p132
      %p139 = scmp.eq.s32.totalorder %s19, 1
      %p140 = por %p138, %p139
      %p141 = scmp.ne.s32.totalorder %s133, %s136
      %p142 = scmp.eq.s32.totalorder %s19, 0
      %p143 = por %p141, %p142
      %p144 = scmp.ne.s32.totalorder %s133, %s136
      %p145 = scmp.eq.s32.totalorder %s24, 1
      %p146 = por %p144, %p145
      %p147 = scmp.ne.s32.totalorder %s136, %s137
      %p148 = scmp.eq.s32.totalorder %s24, 0
      %p149 = por %p147, %p148
      %p150 = scmp.ne.s32.totalorder %s136, %s137
      %p151 = scmp.eq.s32.totalorder %s25, 1
      %p152 = por %p150, %p151
      %p154 = scmp.ne.s32.totalorder %s137, %s153
      %p155 = scmp.eq.s32.totalorder %s25, 0
      %p156 = por %p154, %p155
      %s157 = ssub.s32 %s19, %s26
      %p158 = scmp.eq.s32.totalorder %s157, 0
      %s160 = sadd.s32 %s159, 1
      %s161 = scalar_select %p158, %s159, %s160
      %p164 = pneg %p158
      %p165 = scmp.eq.s32.totalorder %s19, 1
      %p166 = por %p164, %p165
      %p167 = scmp.ne.s32.totalorder %s159, %s162
      %p168 = scmp.eq.s32.totalorder %s19, 0
      %p169 = por %p167, %p168
      %p170 = scmp.ne.s32.totalorder %s159, %s162
      %p171 = scmp.eq.s32.totalorder %s24, 1
      %p172 = por %p170, %p171
      %p173 = scmp.ne.s32.totalorder %s162, %s163
      %p174 = scmp.eq.s32.totalorder %s24, 0
      %p175 = por %p173, %p174
      %p176 = scmp.ne.s32.totalorder %s162, %s163
      %p177 = scmp.eq.s32.totalorder %s25, 1
      %p178 = por %p176, %p177
      %p180 = scmp.ne.s32.totalorder %s163, %s179
      %p181 = scmp.eq.s32.totalorder %s25, 0
      %p182 = por %p180, %p181
      %s183 = ssub.s32 %s19, %s26
      %p184 = scmp.eq.s32.totalorder %s183, 0
      %s186 = sadd.s32 %s185, 1
      %s187 = scalar_select %p184, %s185, %s186
      %p190 = pneg %p184
      %p191 = scmp.eq.s32.totalorder %s19, 1
      %p192 = por %p190, %p191
      %p193 = scmp.ne.s32.totalorder %s185, %s188
      %p194 = scmp.eq.s32.totalorder %s19, 0
      %p195 = por %p193, %p194
      %p196 = scmp.ne.s32.totalorder %s185, %s188
      %p197 = scmp.eq.s32.totalorder %s24, 1
      %p198 = por %p196, %p197
      %p199 = scmp.ne.s32.totalorder %s188, %s189
      %p200 = scmp.eq.s32.totalorder %s24, 0
      %p201 = por %p199, %p200
      %p202 = scmp.ne.s32.totalorder %s188, %s189
      %p203 = scmp.eq.s32.totalorder %s25, 1
      %p204 = por %p202, %p203
      %p206 = scmp.ne.s32.totalorder %s189, %s205
      %p207 = scmp.eq.s32.totalorder %s25, 0
      %p208 = por %p206, %p207
      %p209 = scmp.le.s32.totalorder 1, %s19
      %p210 = scmp.lt.s32.totalorder %s19, 3
      %p211 = pnand %p209, %p210
      %p212 = pneg %p211
      // Predicated region
      $region9: #{tpu_custom_call.1} parent=5 // pred_check
        _
      $region10: #{tpu_custom_call.1} parent=5 // pred_check_branch
        %214 = sbr.rel (%p211) target = $region12
      $region11: #{tpu_custom_call.1} parent=5 // pred_region
        %s215 = ssub.s32 %s19, 1
      $region12: #{tpu_custom_call.1} parent=5 // pred_fallthru
        _
      %p216 = scmp.lt.s32.totalorder %s19, 2
      // Predicated region
      $region13: #{tpu_custom_call.1} parent=5 // pred_check
        %p217 = pneg %p216
      $region14: #{tpu_custom_call.1} parent=5 // pred_check_branch
        %219 = sbr.rel (%p217) target = $region16
      $region15: #{tpu_custom_call.1} parent=5 // pred_region
        // Predicated region
        $region17: #{tpu_custom_call.1} parent=15 // pred_check
          %p220 = pneg %p39
        $region18: #{tpu_custom_call.1} parent=15 // pred_check_branch
          %222 = sbr.rel (%p220) target = $region20
        $region19: #{tpu_custom_call.1} parent=15 // pred_region
          %s223 = sand.u32 %s29, 1
          %s224 = scalar_lea.sflag [#allocation3], %s223
          %s225 = sand.u32 %s29, 1
          %s226 = smul.addr %s225, 4
          %s227 = scalar_lea.vmem [#allocation2], %s226
          %s229 = ssub.s32 64, 64
          %230 = vsyncadd %s224, %s229
          %s231 = smul.addr %s19, 64
          %s232 = scalar_lea.hbm %s0, %s231
          %s234 = sshll.u32 %s227, 4
          %s235 = int_to_ptr.vmem [resolvable:$true] %s234
          %237 = dma.hbm_to_vmem [thread:$0]  %s232, 64, %s235, %s224
        $region20: #{tpu_custom_call.1} parent=15 // pred_fallthru
          _
        // Predicated region
        $region21: #{tpu_custom_call.1} parent=15 // pred_check
          %p238 = pneg %p65
        $region22: #{tpu_custom_call.1} parent=15 // pred_check_branch
          %240 = sbr.rel (%p238) target = $region24
        $region23: #{tpu_custom_call.1} parent=15 // pred_region
          %s241 = sand.u32 %s19, 1
          %s242 = scalar_lea.sflag [#allocation5], %s241
          %s243 = sand.u32 %s55, 1
          %s244 = smul.addr %s243, 8
          %s245 = scalar_lea.vmem [#allocation4], %s244
          %s247 = ssub.s32 128, 128
          %248 = vsyncadd %s242, %s247
          %s249 = smul.addr %s19, 128
          %s250 = scalar_lea.hbm %s1, %s249
          %s252 = sshll.u32 %s245, 4
          %s253 = int_to_ptr.vmem [resolvable:$true] %s252
          %255 = dma.hbm_to_vmem [thread:$0]  %s250, 128, %s253, %s242
        $region24: #{tpu_custom_call.1} parent=15 // pred_fallthru
          _
        // Predicated region
        $region25: #{tpu_custom_call.1} parent=15 // pred_check
          %p256 = pneg %p91
        $region26: #{tpu_custom_call.1} parent=15 // pred_check_branch
          %258 = sbr.rel (%p256) target = $region28
        $region27: #{tpu_custom_call.1} parent=15 // pred_region
          %s259 = sand.u32 %s19, 1
          %s260 = scalar_lea.sflag [#allocation5], %s259
          %s261 = sand.u32 %s81, 1
          %s262 = smul.addr %s261, 4
          %s263 = scalar_lea.vmem [#allocation6], %s262
          %s265 = ssub.s32 64, 64
          %266 = vsyncadd %s260, %s265
          %s267 = smul.addr %s19, 64
          %s268 = scalar_lea.hbm %s2, %s267
          %s270 = sshll.u32 %s263, 4
          %s271 = int_to_ptr.vmem [resolvable:$true] %s270
          %273 = dma.hbm_to_vmem [thread:$0]  %s268, 64, %s271, %s260
        $region28: #{tpu_custom_call.1} parent=15 // pred_fallthru
          _
        // Predicated region
        $region29: #{tpu_custom_call.1} parent=15 // pred_check
          %p274 = pneg %p117
        $region30: #{tpu_custom_call.1} parent=15 // pred_check_branch
          %276 = sbr.rel (%p274) target = $region32
        $region31: #{tpu_custom_call.1} parent=15 // pred_region
          %p277 = scmp.lt.s32.totalorder %s19, 1
          %s278 = scalar_select %p277, %s19, 1
          %s279 = scalar_lea.vmem %s3, %s278
        $region32: #{tpu_custom_call.1} parent=15 // pred_fallthru
          _
      $region16: #{tpu_custom_call.1} parent=5 // pred_fallthru
        _
      %p280 = scmp.le.s32.totalorder 1, %s19
      %p281 = scmp.lt.s32.totalorder %s19, 3
      %p282 = pnand %p280, %p281
      %p283 = pneg %p282
      // Predicated region
      $region33: #{tpu_custom_call.1} parent=5 // pred_check
        _
      $region34: #{tpu_custom_call.1} parent=5 // pred_check_branch
        %285 = sbr.rel (%p282) target = $region36
      $region35: #{tpu_custom_call.1} parent=5 // pred_region
        %s286 = ssub.s32 %s19, 1
        %s287 = sand.u32 %s32, 1
        %s288 = scalar_lea.sflag [#allocation3], %s287
        %s289 = sand.u32 %s32, 1
        %s290 = smul.addr %s289, 4
        %s291 = scalar_lea.vmem [#allocation2], %s290
        // Predicated region
        $region37: #{tpu_custom_call.1} parent=35 // pred_check
          %p292 = pneg %p45
        $region38: #{tpu_custom_call.1} parent=35 // pred_check_branch
          %294 = sbr.rel (%p292) target = $region40
        $region39: #{tpu_custom_call.1} parent=35 // pred_region
          %295 = dma.done %s288, 64
        $region40: #{tpu_custom_call.1} parent=35 // pred_fallthru
          _
        %s296 = sand.u32 %s24, 1
        %s297 = scalar_lea.sflag [#allocation5], %s296
        %s298 = sand.u32 %s58, 1
        %s299 = smul.addr %s298, 8
        %s300 = scalar_lea.vmem [#allocation4], %s299
        // Predicated region
        $region41: #{tpu_custom_call.1} parent=35 // pred_check
          %p301 = pneg %p71
        $region42: #{tpu_custom_call.1} parent=35 // pred_check_branch
          %303 = sbr.rel (%p301) target = $region44
        $region43: #{tpu_custom_call.1} parent=35 // pred_region
          %304 = dma.done %s297, 128
        $region44: #{tpu_custom_call.1} parent=35 // pred_fallthru
          _
        %s305 = sand.u32 %s24, 1
        %s306 = scalar_lea.sflag [#allocation5], %s305
        %s307 = sand.u32 %s84, 1
        %s308 = smul.addr %s307, 4
        %s309 = scalar_lea.vmem [#allocation6], %s308
        // Predicated region
        $region45: #{tpu_custom_call.1} parent=35 // pred_check
          %p310 = pneg %p97
        $region46: #{tpu_custom_call.1} parent=35 // pred_check_branch
          %312 = sbr.rel (%p310) target = $region48
        $region47: #{tpu_custom_call.1} parent=35 // pred_region
          %313 = dma.done %s306, 64
        $region48: #{tpu_custom_call.1} parent=35 // pred_fallthru
          _
        %s314 = sand.u32 %s32, 1
        %s315 = scalar_lea.sflag [#allocation3], %s314
        %s316 = sand.u32 %s32, 1
        %s317 = smul.addr %s316, 4
        %s318 = scalar_lea.vmem [#allocation2], %s317
        %p319 = pneg %p45
        %p320 = pneg %p42
        %s321 = sand.u32 %s24, 1
        %s322 = scalar_lea.sflag [#allocation5], %s321
        %s323 = sand.u32 %s58, 1
        %s324 = smul.addr %s323, 8
        %s325 = scalar_lea.vmem [#allocation4], %s324
        %p326 = pneg %p71
        %p327 = pneg %p68
        %s328 = sand.u32 %s24, 1
        %s329 = scalar_lea.sflag [#allocation5], %s328
        %s330 = sand.u32 %s84, 1
        %s331 = smul.addr %s330, 4
        %s332 = scalar_lea.vmem [#allocation6], %s331
        %p333 = pneg %p97
        %p334 = pneg %p94
        %p335 = scmp.lt.s32.totalorder %s24, 1
        %s336 = scalar_select %p335, %s24, 1
        %s337 = scalar_lea.vmem %s3, %s336
        %p338 = pneg %p123
        %p339 = pneg %p120
        %p340 = pneg %p149
        %p341 = pneg %p146
        %p342 = scmp.lt.s32.totalorder %s24, 1
        %s343 = scalar_select %p342, %s24, 1
        %s344 = scalar_lea.vmem %s4, %s343
        %p345 = pneg %p175
        %p346 = pneg %p172
        %p347 = scmp.lt.s32.totalorder %s24, 1
        %s348 = scalar_select %p347, %s24, 1
        %s349 = scalar_lea.vmem %s5, %s348
        %p350 = pneg %p201
        %p351 = pneg %p198
        %p352 = scmp.lt.s32.totalorder %s24, 1
        %s353 = scalar_select %p352, %s24, 1
        %s354 = scalar_lea.vmem %s6, %s353
        %p355 = scmp.lt.s32.totalorder %s24, 1
        %s356 = scalar_select %p355, %s24, 1
        %s357 = scalar_lea.vmem %s3, %s356
        %p358 = scmp.lt.s32.totalorder %s24, 1
        %s359 = scalar_select %p358, %s24, 1
        %s360 = scalar_lea.vmem %s4, %s359
        %p361 = scmp.lt.s32.totalorder %s24, 1
        %s362 = scalar_select %p361, %s24, 1
        %s363 = scalar_lea.vmem %s5, %s362
        %p364 = scmp.lt.s32.totalorder %s24, 1
        %s365 = scalar_select %p364, %s24, 1
        %s366 = scalar_lea.vmem %s6, %s365
        %v367 = vld [vmem:[%s291] sm:$0xf]
        %v368 = vld [vmem:[%s309] sm:$0xf]
        %v369 = vld [vmem:[%s300] sm:$0xff]
        %v370 = vld [vmem:[%s357] sm:$0x1]
        %vm371 = vcmp.gt.s32.totalorder %v370, 0
        %v372 = vsel %vm371, 1, 0
        %v373 = vcvt.s32.f32 %v372
        %v374 = vsub.f32 %v367, %v368
        %v375 = vand.u32 2147483647, %v374
        %vm376 = vcmp.lt.f32.partialorder %v375, 1.0
        %v377 = vmul.f32 %v374, 0.5
        %v378 = vmul.f32 %v377, %v374
        %v379 = vsub.f32 %v375, 0.5
        %v380 = vsel %vm376, %v378, %v379
        %vm381 = vcmask 1043456
        %v382 = vsel %vm381, %v380, 0.0
        %v383 = vrot.slane %v382, 4
        %v384 = vadd.f32 %v382, %v383
        %v385 = vrot.slane %v384, 2
        %v386 = vadd.f32 %v384, %v385
        %v387 = vrot.slane %v386, 1
        %v388 = vadd.f32 %v386, %v387
        %v389 = vmul.f32 %v388, %v373
        %vm390 = vcmask 1040384
        %v391 = vsel %vm390, %v389, 0.0
        %392 = vadd.xlane.f32.xlu0 %v391
        %v393 = vpop.xlane.xlu0 %392
        %v394 = vrot.slane %v369, 4
        %v395 = vmax.f32 %v369, %v394
        %v396 = vrot.slane %v395, 2
        %v397 = vmax.f32 %v395, %v396
        %v398 = vrot.slane %v397, 1
        %v399 = vmax.f32 %v397, %v398
        %v400 = vsub.f32 %v369, %v399
        %v401 = vmul.f32 %v400, 1.442695
        %v402 = vpow.pop %v401
        %v403 = vrot.slane %v402, 4
        %v404 = vadd.f32 %v402, %v403
        %v405 = vrot.slane %v404, 2
        %v406 = vadd.f32 %v404, %v405
        %v407 = vrot.slane %v406, 1
        %v408 = vadd.f32 %v406, %v407
        %v409 = vlog2.pop %v408
        %v410 = vmul.f32 %v409, 0.6931472
        %v411 = vadd.f32 %v410, %v399
        %v412 = vlaneseq
        %v413 = vshrl.u32 %v412, 7
        %v414 = vlaneseq
        %v415 = vshrl.u32 %v414, 7
        %v416 = vsub.s32 0, %v415
        %v417 = vrot.slane %v370, %v416
        %vm418 = vcmp.eq.s32.totalorder %v413, %v417
        %v419 = vsel %vm418, %v369, 0.0
        %v420 = vrot.slane %v419, 4
        %v421 = vadd.f32 %v419, %v420
        %v422 = vrot.slane %v421, 2
        %v423 = vadd.f32 %v421, %v422
        %v424 = vrot.slane %v423, 1
        %v425 = vadd.f32 %v423, %v424
        %v426 = vsub.f32 %v411, %v425
        %v427 = vmul.f32 %v426, %v373
        %v428 = vsel %vm390, %v427, 0.0
        %429 = vadd.xlane.f32.xlu0 %v428
        %v430 = vpop.xlane.xlu0 %429
        %v431 = vsel %vm390, %v373, 0.0
        %432 = vadd.xlane.f32.xlu0 %v431
        %v433 = vpop.xlane.xlu0 %432
        %v434 = vsel %vm371, 0.0, %v426
        %v435 = vcvt.f32.s32.to.zero.pseudo %v433
        %v436 = vmul.u32 %v435, 3
        %vm437 = vcmp.lt.s32.totalorder %v436, 127
        %v438 = vsel %vm437, %v436, 127
        %v439 = vcvt.s32.f32 %v438
        %vm441 = vcmp.ge.s32.totalorder %v434, 1073741824
        %v442 = vsel %vm441, 1, 0
        %v443 = vcvt.s32.f32 %v442
        %v444 = vsel %vm390, %v443, 0.0
        %445 = vadd.xlane.f32.xlu0 %v444
        %v446 = vpop.xlane.xlu0 %445
        %vm447 = vcmp.ge.f32.partialorder %v446, %v439
        %v448 = vsel %vm447, 1073741824, 0
        %v449 = vor.u32 %v448, 536870912
        %vm450 = vcmp.ge.s32.totalorder %v434, %v449
        %v451 = vsel %vm450, 1, 0
        %v452 = vcvt.s32.f32 %v451
        %v453 = vsel %vm390, %v452, 0.0
        %454 = vadd.xlane.f32.xlu0 %v453
        %v455 = vpop.xlane.xlu0 %454
        %vm456 = vcmp.ge.f32.partialorder %v455, %v439
        %v457 = vsel %vm456, %v449, %v448
        %v458 = vor.u32 %v457, 268435456
        %vm459 = vcmp.ge.s32.totalorder %v434, %v458
        %v460 = vsel %vm459, 1, 0
        %v461 = vcvt.s32.f32 %v460
        %v462 = vsel %vm390, %v461, 0.0
        %463 = vadd.xlane.f32.xlu0 %v462
        %v464 = vpop.xlane.xlu0 %463
        %vm465 = vcmp.ge.f32.partialorder %v464, %v439
        %v466 = vsel %vm465, %v458, %v457
        %v467 = vor.u32 %v466, 134217728
        %vm468 = vcmp.ge.s32.totalorder %v434, %v467
        %v469 = vsel %vm468, 1, 0
        %v470 = vcvt.s32.f32 %v469
        %v471 = vsel %vm390, %v470, 0.0
        %472 = vadd.xlane.f32.xlu0 %v471
        %v473 = vpop.xlane.xlu0 %472
        %vm474 = vcmp.ge.f32.partialorder %v473, %v439
        %v475 = vsel %vm474, %v467, %v466
        %v476 = vor.u32 %v475, 67108864
        %vm477 = vcmp.ge.s32.totalorder %v434, %v476
        %v478 = vsel %vm477, 1, 0
        %v479 = vcvt.s32.f32 %v478
        %v480 = vsel %vm390, %v479, 0.0
        %481 = vadd.xlane.f32.xlu0 %v480
        %v482 = vpop.xlane.xlu0 %481
        %vm483 = vcmp.ge.f32.partialorder %v482, %v439
        %v484 = vsel %vm483, %v476, %v475
        %v485 = vor.u32 %v484, 33554432
        %vm486 = vcmp.ge.s32.totalorder %v434, %v485
        %v487 = vsel %vm486, 1, 0
        %v488 = vcvt.s32.f32 %v487
        %v489 = vsel %vm390, %v488, 0.0
        %490 = vadd.xlane.f32.xlu0 %v489
        %v491 = vpop.xlane.xlu0 %490
        %vm492 = vcmp.ge.f32.partialorder %v491, %v439
        %v493 = vsel %vm492, %v485, %v484
        %v494 = vor.u32 %v493, 16777216
        %vm495 = vcmp.ge.s32.totalorder %v434, %v494
        %v496 = vsel %vm495, 1, 0
        %v497 = vcvt.s32.f32 %v496
        %v498 = vsel %vm390, %v497, 0.0
        %499 = vadd.xlane.f32.xlu0 %v498
        %v500 = vpop.xlane.xlu0 %499
        %vm501 = vcmp.ge.f32.partialorder %v500, %v439
        %v502 = vsel %vm501, %v494, %v493
        %v503 = vor.u32 %v502, 8388608
        %vm504 = vcmp.ge.s32.totalorder %v434, %v503
        %v505 = vsel %vm504, 1, 0
        %v506 = vcvt.s32.f32 %v505
        %v507 = vsel %vm390, %v506, 0.0
        %508 = vadd.xlane.f32.xlu0 %v507
        %v509 = vpop.xlane.xlu0 %508
        %vm510 = vcmp.ge.f32.partialorder %v509, %v439
        %v511 = vsel %vm510, %v503, %v502
        %v512 = vor.u32 %v511, 4194304
        %vm513 = vcmp.ge.s32.totalorder %v434, %v512
        %v514 = vsel %vm513, 1, 0
        %v515 = vcvt.s32.f32 %v514
        %v516 = vsel %vm390, %v515, 0.0
        %517 = vadd.xlane.f32.xlu0 %v516
        %v518 = vpop.xlane.xlu0 %517
        %vm519 = vcmp.ge.f32.partialorder %v518, %v439
        %v520 = vsel %vm519, %v512, %v511
        %v521 = vor.u32 %v520, 2097152
        %vm522 = vcmp.ge.s32.totalorder %v434, %v521
        %v523 = vsel %vm522, 1, 0
        %v524 = vcvt.s32.f32 %v523
        %v525 = vsel %vm390, %v524, 0.0
        %526 = vadd.xlane.f32.xlu0 %v525
        %v527 = vpop.xlane.xlu0 %526
        %vm528 = vcmp.ge.f32.partialorder %v527, %v439
        %v529 = vsel %vm528, %v521, %v520
        %v530 = vor.u32 %v529, 1048576
        %vm531 = vcmp.ge.s32.totalorder %v434, %v530
        %v532 = vsel %vm531, 1, 0
        %v533 = vcvt.s32.f32 %v532
        %v534 = vsel %vm390, %v533, 0.0
        %535 = vadd.xlane.f32.xlu0 %v534
        %v536 = vpop.xlane.xlu0 %535
        %vm537 = vcmp.ge.f32.partialorder %v536, %v439
        %v538 = vsel %vm537, %v530, %v529
        %v539 = vor.u32 %v538, 524288
        %vm540 = vcmp.ge.s32.totalorder %v434, %v539
        %v541 = vsel %vm540, 1, 0
        %v542 = vcvt.s32.f32 %v541
        %v543 = vsel %vm390, %v542, 0.0
        %544 = vadd.xlane.f32.xlu0 %v543
        %v545 = vpop.xlane.xlu0 %544
        %vm546 = vcmp.ge.f32.partialorder %v545, %v439
        %v547 = vsel %vm546, %v539, %v538
        %v548 = vor.u32 %v547, 262144
        %vm549 = vcmp.ge.s32.totalorder %v434, %v548
        %v550 = vsel %vm549, 1, 0
        %v551 = vcvt.s32.f32 %v550
        %v552 = vsel %vm390, %v551, 0.0
        %553 = vadd.xlane.f32.xlu0 %v552
        %v554 = vpop.xlane.xlu0 %553
        %vm555 = vcmp.ge.f32.partialorder %v554, %v439
        %v556 = vsel %vm555, %v548, %v547
        %v557 = vor.u32 %v556, 131072
        %vm558 = vcmp.ge.s32.totalorder %v434, %v557
        %v559 = vsel %vm558, 1, 0
        %v560 = vcvt.s32.f32 %v559
        %v561 = vsel %vm390, %v560, 0.0
        %562 = vadd.xlane.f32.xlu0 %v561
        %v563 = vpop.xlane.xlu0 %562
        %vm564 = vcmp.ge.f32.partialorder %v563, %v439
        %v565 = vsel %vm564, %v557, %v556
        %v566 = vor.u32 %v565, 65536
        %vm567 = vcmp.ge.s32.totalorder %v434, %v566
        %v568 = vsel %vm567, 1, 0
        %v569 = vcvt.s32.f32 %v568
        %v570 = vsel %vm390, %v569, 0.0
        %571 = vadd.xlane.f32.xlu0 %v570
        %v572 = vpop.xlane.xlu0 %571
        %vm573 = vcmp.ge.f32.partialorder %v572, %v439
        %v574 = vsel %vm573, %v566, %v565
        %v575 = vor.u32 %v574, 32768
        %vm576 = vcmp.ge.s32.totalorder %v434, %v575
        %v577 = vsel %vm576, 1, 0
        %v578 = vcvt.s32.f32 %v577
        %v579 = vsel %vm390, %v578, 0.0
        %580 = vadd.xlane.f32.xlu0 %v579
        %v581 = vpop.xlane.xlu0 %580
        %vm582 = vcmp.ge.f32.partialorder %v581, %v439
        %v583 = vsel %vm582, %v575, %v574
        %v584 = vor.u32 %v583, 16384
        %vm585 = vcmp.ge.s32.totalorder %v434, %v584
        %v586 = vsel %vm585, 1, 0
        %v587 = vcvt.s32.f32 %v586
        %v588 = vsel %vm390, %v587, 0.0
        %589 = vadd.xlane.f32.xlu0 %v588
        %v590 = vpop.xlane.xlu0 %589
        %vm591 = vcmp.ge.f32.partialorder %v590, %v439
        %v592 = vsel %vm591, %v584, %v583
        %v593 = vor.u32 %v592, 8192
        %vm594 = vcmp.ge.s32.totalorder %v434, %v593
        %v595 = vsel %vm594, 1, 0
        %v596 = vcvt.s32.f32 %v595
        %v597 = vsel %vm390, %v596, 0.0
        %598 = vadd.xlane.f32.xlu0 %v597
        %v599 = vpop.xlane.xlu0 %598
        %vm600 = vcmp.ge.f32.partialorder %v599, %v439
        %v601 = vsel %vm600, %v593, %v592
        %v602 = vor.u32 %v601, 4096
        %vm603 = vcmp.ge.s32.totalorder %v434, %v602
        %v604 = vsel %vm603, 1, 0
        %v605 = vcvt.s32.f32 %v604
        %v606 = vsel %vm390, %v605, 0.0
        %607 = vadd.xlane.f32.xlu0 %v606
        %v608 = vpop.xlane.xlu0 %607
        %vm609 = vcmp.ge.f32.partialorder %v608, %v439
        %v610 = vsel %vm609, %v602, %v601
        %v611 = vor.u32 %v610, 2048
        %vm612 = vcmp.ge.s32.totalorder %v434, %v611
        %v613 = vsel %vm612, 1, 0
        %v614 = vcvt.s32.f32 %v613
        %v615 = vsel %vm390, %v614, 0.0
        %616 = vadd.xlane.f32.xlu0 %v615
        %v617 = vpop.xlane.xlu0 %616
        %vm618 = vcmp.ge.f32.partialorder %v617, %v439
        %v619 = vsel %vm618, %v611, %v610
        %v620 = vor.u32 %v619, 1024
        %vm621 = vcmp.ge.s32.totalorder %v434, %v620
        %v622 = vsel %vm621, 1, 0
        %v623 = vcvt.s32.f32 %v622
        %v624 = vsel %vm390, %v623, 0.0
        %625 = vadd.xlane.f32.xlu0 %v624
        %v626 = vpop.xlane.xlu0 %625
        %vm627 = vcmp.ge.f32.partialorder %v626, %v439
        %v628 = vsel %vm627, %v620, %v619
        %v629 = vor.u32 %v628, 512
        %vm630 = vcmp.ge.s32.totalorder %v434, %v629
        %v631 = vsel %vm630, 1, 0
        %v632 = vcvt.s32.f32 %v631
        %v633 = vsel %vm390, %v632, 0.0
        %634 = vadd.xlane.f32.xlu0 %v633
        %v635 = vpop.xlane.xlu0 %634
        %vm636 = vcmp.ge.f32.partialorder %v635, %v439
        %v637 = vsel %vm636, %v629, %v628
        %v638 = vor.u32 %v637, 256
        %vm639 = vcmp.ge.s32.totalorder %v434, %v638
        %v640 = vsel %vm639, 1, 0
        %v641 = vcvt.s32.f32 %v640
        %v642 = vsel %vm390, %v641, 0.0
        %643 = vadd.xlane.f32.xlu0 %v642
        %v644 = vpop.xlane.xlu0 %643
        %vm645 = vcmp.ge.f32.partialorder %v644, %v439
        %v646 = vsel %vm645, %v638, %v637
        %v647 = vor.u32 %v646, 128
        %vm648 = vcmp.ge.s32.totalorder %v434, %v647
        %v649 = vsel %vm648, 1, 0
        %v650 = vcvt.s32.f32 %v649
        %v651 = vsel %vm390, %v650, 0.0
        %652 = vadd.xlane.f32.xlu0 %v651
        %v653 = vpop.xlane.xlu0 %652
        %vm654 = vcmp.ge.f32.partialorder %v653, %v439
        %v655 = vsel %vm654, %v647, %v646
        %v656 = vor.u32 %v655, 64
        %vm657 = vcmp.ge.s32.totalorder %v434, %v656
        %v658 = vsel %vm657, 1, 0
        %v659 = vcvt.s32.f32 %v658
        %v660 = vsel %vm390, %v659, 0.0
        %661 = vadd.xlane.f32.xlu0 %v660
        %v662 = vpop.xlane.xlu0 %661
        %vm663 = vcmp.ge.f32.partialorder %v662, %v439
        %v664 = vsel %vm663, %v656, %v655
        %v665 = vor.u32 %v664, 32
        %vm666 = vcmp.ge.s32.totalorder %v434, %v665
        %v667 = vsel %vm666, 1, 0
        %v668 = vcvt.s32.f32 %v667
        %v669 = vsel %vm390, %v668, 0.0
        %670 = vadd.xlane.f32.xlu0 %v669
        %v671 = vpop.xlane.xlu0 %670
        %vm672 = vcmp.ge.f32.partialorder %v671, %v439
        %v673 = vsel %vm672, %v665, %v664
        %v674 = vor.u32 %v673, 16
        %vm675 = vcmp.ge.s32.totalorder %v434, %v674
        %v676 = vsel %vm675, 1, 0
        %v677 = vcvt.s32.f32 %v676
        %v678 = vsel %vm390, %v677, 0.0
        %679 = vadd.xlane.f32.xlu0 %v678
        %v680 = vpop.xlane.xlu0 %679
        %vm681 = vcmp.ge.f32.partialorder %v680, %v439
        %v682 = vsel %vm681, %v674, %v673
        %v683 = vor.u32 %v682, 8
        %vm684 = vcmp.ge.s32.totalorder %v434, %v683
        %v685 = vsel %vm684, 1, 0
        %v686 = vcvt.s32.f32 %v685
        %v687 = vsel %vm390, %v686, 0.0
        %688 = vadd.xlane.f32.xlu0 %v687
        %v689 = vpop.xlane.xlu0 %688
        %vm690 = vcmp.ge.f32.partialorder %v689, %v439
        %v691 = vsel %vm690, %v683, %v682
        %v692 = vor.u32 %v691, 4
        %vm693 = vcmp.ge.s32.totalorder %v434, %v692
        %v694 = vsel %vm693, 1, 0
        %v695 = vcvt.s32.f32 %v694
        %v696 = vsel %vm390, %v695, 0.0
        %697 = vadd.xlane.f32.xlu0 %v696
        %v698 = vpop.xlane.xlu0 %697
        %vm699 = vcmp.ge.f32.partialorder %v698, %v439
        %v700 = vsel %vm699, %v692, %v691
        %v701 = vor.u32 %v700, 2
        %vm702 = vcmp.ge.s32.totalorder %v434, %v701
        %v703 = vsel %vm702, 1, 0
        %v704 = vcvt.s32.f32 %v703
        %v705 = vsel %vm390, %v704, 0.0
        %706 = vadd.xlane.f32.xlu0 %v705
        %v707 = vpop.xlane.xlu0 %706
        %vm708 = vcmp.ge.f32.partialorder %v707, %v439
        %v709 = vsel %vm708, %v701, %v700
        %v710 = vor.u32 %v709, 1
        %vm711 = vcmp.ge.s32.totalorder %v434, %v710
        %v712 = vsel %vm711, 1, 0
        %v713 = vcvt.s32.f32 %v712
        %v714 = vsel %vm390, %v713, 0.0
        %715 = vadd.xlane.f32.xlu0 %v714
        %v716 = vpop.xlane.xlu0 %715
        %vm717 = vcmp.ge.f32.partialorder %v716, %v439
        %v718 = vsel %vm717, %v710, %v709
        %vm720 = vcmp.gt.s32.totalorder %v434, %v718
        %v721 = vsel %vm720, 1, 0
        %v722 = vcvt.s32.f32 %v721
        %v723 = vsel %vm390, %v722, 0.0
        %724 = vadd.xlane.f32.xlu0 %v723
        %v725 = vpop.xlane.xlu0 %724
        %v726 = vsel %vm720, %v434, 0.0
        %v727 = vsel %vm390, %v726, 0.0
        %728 = vadd.xlane.f32.xlu0 %v727
        %v729 = vpop.xlane.xlu0 %728
        %vm730 = vcmp.gt.f32.partialorder %v439, 0.0
        %v731 = vsub.f32 %v439, %v725
        %v732 = vmul.f32 %v731, %v718
        %v733 = vadd.f32 %v729, %v732
        %v734 = vsel %vm730, %v733, 0.0
        %v735 = vadd.f32 %v430, %v734
        %vm736 = vcmask 0
        %737 = vst.msk [vmem:[%s360] sm:$0x1] %vm736, %v393
        %738 = vst.msk [vmem:[%s363] sm:$0x1] %vm736, %v735
        %739 = vst.msk [vmem:[%s366] sm:$0x1] %vm736, %v433
        %p740 = scmp.lt.s32.totalorder %s24, 1
        %s741 = scalar_select %p740, %s24, 1
        %s742 = scalar_lea.vmem %s4, %s741
        %p743 = scmp.lt.s32.totalorder %s24, 1
        %s744 = scalar_select %p743, %s24, 1
        %s745 = scalar_lea.vmem %s5, %s744
        %p746 = scmp.lt.s32.totalorder %s24, 1
        %s747 = scalar_select %p746, %s24, 1
        %s748 = scalar_lea.vmem %s6, %s747
        // Predicated region
        $region49: #{tpu_custom_call.1} parent=35 // pred_check
          %p749 = pneg %p146
        $region50: #{tpu_custom_call.1} parent=35 // pred_check_branch
          %751 = sbr.rel (%p749) target = $region52
        $region51: #{tpu_custom_call.1} parent=35 // pred_region
          _
        $region52: #{tpu_custom_call.1} parent=35 // pred_fallthru
          _
        // Predicated region
        $region53: #{tpu_custom_call.1} parent=35 // pred_check
          %p752 = pneg %p172
        $region54: #{tpu_custom_call.1} parent=35 // pred_check_branch
          %754 = sbr.rel (%p752) target = $region56
        $region55: #{tpu_custom_call.1} parent=35 // pred_region
          _
        $region56: #{tpu_custom_call.1} parent=35 // pred_fallthru
          _
        // Predicated region
        $region57: #{tpu_custom_call.1} parent=35 // pred_check
          %p755 = pneg %p198
        $region58: #{tpu_custom_call.1} parent=35 // pred_check_branch
          %757 = sbr.rel (%p755) target = $region60
        $region59: #{tpu_custom_call.1} parent=35 // pred_region
          _
        $region60: #{tpu_custom_call.1} parent=35 // pred_fallthru
          _
      $region36: #{tpu_custom_call.1} parent=5 // pred_fallthru
        _
      %p758 = scmp.le.s32.totalorder 2, %s19
      // Predicated region
      $region61: #{tpu_custom_call.1} parent=5 // pred_check
        %p759 = pneg %p758
      $region62: #{tpu_custom_call.1} parent=5 // pred_check_branch
        %761 = sbr.rel (%p759) target = $region64
      $region63: #{tpu_custom_call.1} parent=5 // pred_region
        %s762 = ssub.s32 %s19, 2
        // Predicated region
        $region65: #{tpu_custom_call.1} parent=63 // pred_check
          %p763 = pneg %p152
        $region66: #{tpu_custom_call.1} parent=63 // pred_check_branch
          %765 = sbr.rel (%p763) target = $region68
        $region67: #{tpu_custom_call.1} parent=63 // pred_region
          %p766 = scmp.lt.s32.totalorder %s25, 1
          %s767 = scalar_select %p766, %s25, 1
          %s768 = scalar_lea.vmem %s4, %s767
        $region68: #{tpu_custom_call.1} parent=63 // pred_fallthru
          _
        // Predicated region
        $region69: #{tpu_custom_call.1} parent=63 // pred_check
          %p769 = pneg %p178
        $region70: #{tpu_custom_call.1} parent=63 // pred_check_branch
          %771 = sbr.rel (%p769) target = $region72
        $region71: #{tpu_custom_call.1} parent=63 // pred_region
          %p772 = scmp.lt.s32.totalorder %s25, 1
          %s773 = scalar_select %p772, %s25, 1
          %s774 = scalar_lea.vmem %s5, %s773
        $region72: #{tpu_custom_call.1} parent=63 // pred_fallthru
          _
        // Predicated region
        $region73: #{tpu_custom_call.1} parent=63 // pred_check
          %p775 = pneg %p204
        $region74: #{tpu_custom_call.1} parent=63 // pred_check_branch
          %777 = sbr.rel (%p775) target = $region76
        $region75: #{tpu_custom_call.1} parent=63 // pred_region
          %p778 = scmp.lt.s32.totalorder %s25, 1
          %s779 = scalar_select %p778, %s25, 1
          %s780 = scalar_lea.vmem %s6, %s779
        $region76: #{tpu_custom_call.1} parent=63 // pred_fallthru
          _
      $region64: #{tpu_custom_call.1} parent=5 // pred_fallthru
        _
    $region6: #{tpu_custom_call.1} parent=1 // loop_footer
      %s23 = sadd.s32 1, %s19
    $region7: #{tpu_custom_call.1} parent=1 // loop_footer_branch
      %18 = sbr.rel target = $region3
    $region8: #{tpu_custom_call.1} parent=1 // loop_exit
      _
    %781 = vsyncpa [#allocation3], 1
    %s782 = scalar_lea.sflag [#allocation3], 1
    %783 = vsyncpa %s782, 1
    %784 = vsyncpa [#allocation5], 1
    %s785 = scalar_lea.sflag [#allocation5], 1
    %786 = vsyncpa %s785, 1

</llo_original>
